<compile_context>
chip_gen: v7x
topology: tpu7x:2x2x1
jax: 0.10.0
libtpu: 0.0.40
codegen_flags: <defaults>
</compile_context>

<pallas_src>
import functools
import math

import jax
import jax.numpy as jnp
from jax.experimental import pallas as pl
from jax.experimental.pallas import tpu as pltpu


def _round_up(x, m):
    return ((x + m - 1) // m) * m


# --------------------------------------------------------------------------
# Kernel: one LGConv layer (row-tiled A @ X with K reduction) + alpha-sum.
# --------------------------------------------------------------------------
def _lgconv_layer_kernel(a_ref, x_ref, out_prev_ref, alpha_ref,
                         x_new_ref, out_new_ref, acc_ref, *, tk):
    """acc = sum_k A[i,k] @ X[k] (bf16 in, f32 acc);
       x_new = acc (bf16); out_new = out_prev + alpha * acc (f32)."""
    k = pl.program_id(1)

    @pl.when(k == 0)
    def _():
        acc_ref[...] = jnp.zeros_like(acc_ref)

    start = pl.multiple_of(k * tk, tk)
    x_blk = x_ref[pl.ds(start, tk), :]                       # (TK, Dp) bf16
    acc_ref[...] += jnp.dot(a_ref[...], x_blk,
                            preferred_element_type=jnp.float32)

    @pl.when(k == pl.num_programs(1) - 1)
    def _():
        acc = acc_ref[...]
        x_new_ref[...] = acc.astype(x_new_ref.dtype)
        out_new_ref[...] = out_prev_ref[...] + alpha_ref[0] * acc


# --------------------------------------------------------------------------
# Kernel: item-row L2 normalization * scaling_factor (row-tiled epilogue).
# --------------------------------------------------------------------------
def _item_norm_kernel(x_ref, o_ref, *, tm, num_users, scaling_factor):
    base = pl.program_id(0) * tm
    x = x_ref[...]
    row = jax.lax.broadcasted_iota(jnp.int32, x.shape, 0) + base
    sumsq = jnp.sum(x * x, axis=-1, keepdims=True)
    # F.normalize(p=2): x / max(||x||, 1e-12)  ==  x * rsqrt(max(||x||^2, 1e-24))
    inv = jax.lax.rsqrt(jnp.maximum(sumsq, 1e-24)) * scaling_factor
    o_ref[...] = jnp.where(row >= num_users, x * inv, x)


# --------------------------------------------------------------------------
# Kernel: rank = sum(src*dst, -1); pos/neg[i, j] = rank[j] + beta[i]
# (reproduces the (B,) + (B,1) -> (B,B) broadcast of the PyTorch code).
# Inputs are channel-major (D, 2B) so no in-kernel transpose is needed.
# --------------------------------------------------------------------------
def _score_kernel(src_t_ref, dst_t_ref, bpos_ref, bneg_ref, pos_ref, neg_ref,
                  *, num_pairs):
    b = num_pairs
    prod = src_t_ref[...] * dst_t_ref[...]                   # (D, 2B)
    rank = jnp.sum(prod, axis=0, keepdims=True)              # (1, 2B)
    pos_ref[...] = bpos_ref[...] + rank[:, :b]               # (B,1)+(1,B)->(B,B)
    neg_ref[...] = bneg_ref[...] + rank[:, b:]


# --------------------------------------------------------------------------
# Wrappers
# --------------------------------------------------------------------------
def lightgcn_get_embedding(a_norm, emb_weight, alpha, *, num_users,
                           scaling_factor, block=256):
    n, d = emb_weight.shape
    num_layers = int(alpha.shape[0]) - 1

    tm = tk = block
    n_pad = _round_up(n, block)
    d_pad = _round_up(d, 128)                 # lane-dense stores / MXU columns

    # bf16 A / X for the HBM-bound matmul; accumulation stays f32 in-kernel.
    a_bf16 = jnp.pad(a_norm, ((0, n_pad - n), (0, n_pad - n))).astype(jnp.bfloat16)
    x_f32 = jnp.pad(emb_weight.astype(jnp.float32),
                    ((0, n_pad - n), (0, d_pad - d)))
    out = x_f32 * alpha[0]                    # running alpha-weighted sum (f32)
    x_bf16 = x_f32.astype(jnp.bfloat16)

    grid = (n_pad // tm, n_pad // tk)

    # Explicit VMEM budget (default scoped limit is 32 MiB on v6e / 16 MiB on
    # v5e; v7x only has 64 MiB physical -> stay well under with headroom).
    vmem_need = (2 * tm * tk * 2              # double-buffered bf16 A tiles
                 + 2 * n_pad * d_pad * 2      # resident bf16 X (generous x2)
                 + 2 * tm * d_pad * 4 * 2     # out_prev in + out_new out (f32)
                 + 2 * tm * d_pad * 2         # x_new out (bf16)
                 + tm * d_pad * 4)            # f32 accumulator scratch
    vmem_limit = min(max(int(1.5 * vmem_need), 16 * 1024 * 1024),
                     56 * 1024 * 1024)

    layer_call = pl.pallas_call(
        functools.partial(_lgconv_layer_kernel, tk=tk),
        out_shape=(jax.ShapeDtypeStruct((n_pad, d_pad), jnp.bfloat16),
                   jax.ShapeDtypeStruct((n_pad, d_pad), jnp.float32)),
        grid=grid,
        in_specs=[
            # A tiles streamed per (row-block, k-block).
            # (tuning knob: pipeline_mode=pl.Buffered(3) if DMA is exposed)
            pl.BlockSpec((tm, tk), lambda i, k: (i, k)),
            # X fully resident (constant index map -> fetched once).
            pl.BlockSpec((n_pad, d_pad), lambda i, k: (0, 0)),
            # Running sum: one row-block per i (re-fetched only when i changes).
            pl.BlockSpec((tm, d_pad), lambda i, k: (i, 0)),
            # Per-layer alpha scalar in SMEM.
            pl.BlockSpec(memory_space=pltpu.MemorySpace.SMEM),
        ],
        out_specs=(pl.BlockSpec((tm, d_pad), lambda i, k: (i, 0)),
                   pl.BlockSpec((tm, d_pad), lambda i, k: (i, 0))),
        scratch_shapes=[pltpu.VMEM((tm, d_pad), jnp.float32)],
        input_output_aliases={2: 1},          # carry out_prev -> out_new in place
        compiler_params=pltpu.CompilerParams(
            dimension_semantics=("parallel", "arbitrary"),
            vmem_limit_bytes=vmem_limit),
    )

    for layer in range(num_layers):
        alpha_l = alpha[layer + 1].reshape(1).astype(jnp.float32)
        x_bf16, out = layer_call(a_bf16, x_bf16, out, alpha_l)

    norm_call = pl.pallas_call(
        functools.partial(_item_norm_kernel, tm=tm, num_users=num_users,
                          scaling_factor=scaling_factor),
        out_shape=jax.ShapeDtypeStruct((n_pad, d_pad), jnp.float32),
        grid=(n_pad // tm,),
        in_specs=[pl.BlockSpec((tm, d_pad), lambda i: (i, 0))],
        out_specs=pl.BlockSpec((tm, d_pad), lambda i: (i, 0)),
        compiler_params=pltpu.CompilerParams(
            dimension_semantics=("parallel",)),
    )
    out = norm_call(out)
    return out[:n, :d]


def lightgcn_rank(out_src, out_dst, beta_pos, beta_neg):
    two_b, d = out_src.shape
    b = two_b // 2
    # Layout plumbing: channel-major so rank is a sublane reduce in-kernel.
    src_t = out_src.T.astype(jnp.float32)     # (D, 2B)
    dst_t = out_dst.T.astype(jnp.float32)
    # TODO(synk): for large B, tile this kernel over B-blocks and fuse the row
    # gathers via PrefetchScalarGridSpec + pl.Element instead of JAX gathers.
    return pl.pallas_call(
        functools.partial(_score_kernel, num_pairs=b),
        out_shape=(jax.ShapeDtypeStruct((b, b), jnp.float32),
                   jax.ShapeDtypeStruct((b, b), jnp.float32)),
        grid=(1,),
        in_specs=[
            pl.BlockSpec((d, two_b), lambda i: (0, 0)),
            pl.BlockSpec((d, two_b), lambda i: (0, 0)),
            pl.BlockSpec((b, 1), lambda i: (0, 0)),
            pl.BlockSpec((b, 1), lambda i: (0, 0)),
        ],
        out_specs=(pl.BlockSpec((b, b), lambda i: (0, 0)),
                   pl.BlockSpec((b, b), lambda i: (0, 0))),
    )(src_t, dst_t, beta_pos, beta_neg)


@functools.partial(jax.jit,
                   static_argnames=("num_users", "num_items", "scaling_factor"))
def aim_lightgcn_forward(emb_weight, beta_weight, alpha, edge_index,
                         edge_label_index, *, num_users, num_items,
                         scaling_factor):
    n = emb_weight.shape[0]
    # gcn_norm without self-loops, built densely: A[dst, src] = 1, then
    # A_norm = D^{-1/2} A D^{-1/2}.
    # TODO(synk): for realistic graph sizes replace the dense N x N adjacency
    # with a sparse (row-ptr / col-idx) representation driven through a
    # scalar-prefetch gather kernel; dense traffic is num_layers * N^2 bytes.
    src, dst = edge_index[0], edge_index[1]
    a = jnp.zeros((n, n), jnp.float32).at[dst, src].add(1.0)
    deg = a.sum(axis=1)
    dinv = jnp.where(deg > 0, jax.lax.rsqrt(jnp.maximum(deg, 1e-12)), 0.0)
    a_norm = dinv[:, None] * a * dinv[None, :]

    out = lightgcn_get_embedding(a_norm, emb_weight, alpha,
                                 num_users=num_users,
                                 scaling_factor=scaling_factor)

    # Gathers (index glue).
    out_src = out[edge_label_index[0]]                  # (2B, D)
    out_dst = out[edge_label_index[1]]                  # (2B, D)
    b = edge_label_index.shape[1] // 2
    pos_item = edge_label_index[1, :b]
    neg_item = edge_label_index[1, b:]
    beta_pos = beta_weight[pos_item]                    # (B, 1)
    beta_neg = beta_weight[neg_item]                    # (B, 1)

    return lightgcn_rank(out_src, out_dst, beta_pos, beta_neg)


# --------------------------------------------------------------------------
# Pure-JAX reference (mirrors the PyTorch forward) for a sanity check.
# --------------------------------------------------------------------------
def _reference_forward(emb_weight, beta_weight, alpha, edge_index,
                       edge_label_index, num_users, num_items, scaling_factor):
    n = emb_weight.shape[0]
    src, dst = edge_index[0], edge_index[1]
    a = jnp.zeros((n, n), jnp.float32).at[dst, src].add(1.0)
    deg = a.sum(axis=1)
    dinv = jnp.where(deg > 0, 1.0 / jnp.sqrt(deg), 0.0)
    a_norm = dinv[:, None] * a * dinv[None, :]
    x = emb_weight
    out = x * alpha[0]
    for l in range(alpha.shape[0] - 1):
        x = a_norm @ x
        out = out + x * alpha[l + 1]
    user, item = out[:num_users], out[num_users:]
    item = item / jnp.maximum(
        jnp.linalg.norm(item, axis=1, keepdims=True), 1e-12) * scaling_factor
    out = jnp.concatenate([user, item], axis=0)
    out_src = out[edge_label_index[0]]
    out_dst = out[edge_label_index[1]]
    rank = (out_src * out_dst).sum(-1)
    b = edge_label_index.shape[1] // 2
    pos = rank[:b] + beta_weight[edge_label_index[1, :b]]
    neg = rank[b:] + beta_weight[edge_label_index[1, b:]]
    return pos, neg


if __name__ == "__main__":
    num_users, num_items = 8, 8
    num_nodes = num_users + num_items
    embedding_dim = 32
    num_layers = 2
    scaling_factor = 1.5
    num_pairs = 8  # B positive + B negative labelled edges

    key = jax.random.PRNGKey(0)
    k_emb, k_beta, k_pos, k_neg = jax.random.split(key, 4)

    # xavier_uniform_ init (deterministic, matches the shapes in __init__)
    bound_e = math.sqrt(6.0 / (num_nodes + embedding_dim))
    emb_weight = jax.random.uniform(k_emb, (num_nodes, embedding_dim),
                                    jnp.float32, -bound_e, bound_e)
    bound_b = math.sqrt(6.0 / (num_nodes + 1))
    beta_weight = jax.random.uniform(k_beta, (num_nodes, 1),
                                     jnp.float32, -bound_b, bound_b)
    alpha = jnp.full((num_layers + 1,), 1.0 / (num_layers + 1), jnp.float32)

    users = (jnp.arange(num_pairs, dtype=jnp.int32) % num_users)
    pos_items = (num_users +
                 jax.random.randint(k_pos, (num_pairs,), 0, num_items)).astype(jnp.int32)
    neg_items = (num_users +
                 jax.random.randint(k_neg, (num_pairs,), 0, num_items)).astype(jnp.int32)

    # message-passing graph: user <-> positive item, both directions
    edge_index = jnp.stack([
        jnp.concatenate([users, pos_items]),
        jnp.concatenate([pos_items, users]),
    ]).astype(jnp.int32)

    # labelled edges: first half positive, second half negative (node indices)
    edge_label_index = jnp.stack([
        jnp.concatenate([users, users]),
        jnp.concatenate([pos_items, neg_items]),
    ]).astype(jnp.int32)

    # TODO(synk): sparse Adj inputs (is_sparse/to_edge_index) are represented
    # via the dense normalized adjacency above.
    pos_rank, neg_rank = aim_lightgcn_forward(
        emb_weight, beta_weight, alpha, edge_index, edge_label_index,
        num_users=num_users, num_items=num_items,
        scaling_factor=scaling_factor)
    jax.block_until_ready((pos_rank, neg_rank))

    assert pos_rank.shape == (num_pairs, num_pairs)
    assert neg_rank.shape == (num_pairs, num_pairs)

    ref_pos, ref_neg = _reference_forward(
        emb_weight, beta_weight, alpha, edge_index, edge_label_index,
        num_users, num_items, scaling_factor)
    max_err = float(jnp.maximum(jnp.max(jnp.abs(pos_rank - ref_pos)),
                                jnp.max(jnp.abs(neg_rank - ref_neg))))
    assert max_err < 5e-2, f"mismatch vs reference: {max_err}"

    print("KERNEL_OK")
</pallas_src>

<mosaic_0001>
module attributes {stable_mosaic.version = 11 : i64} {
  func.func private @main(%arg0: i32) attributes {dimension_semantics = [#tpu.dimension_semantics<core_parallel>], iteration_bounds = array<i64: 2>, tpu.core_type = #tpu.core_type<sc_scalar_subcore>, window_params = []} {
    return
  }
}

module attributes {stable_mosaic.version = 11 : i64} {
  func.func private @main(%arg0: i32) attributes {dimension_semantics = [#tpu.dimension_semantics<core_parallel>], iteration_bounds = array<i64: 2>, tpu.core_type = #tpu.core_type<sc_scalar_subcore>, window_params = []} {
    return
  }
}

module attributes {stable_mosaic.version = 11 : i64} {
  func.func @_lgconv_layer_kernel(%arg0: i32, %arg1: i32, %arg2: memref<256x256xbf16, #tpu.memory_space<vmem>>, %arg3: memref<256x128xbf16, #tpu.memory_space<vmem>>, %arg4: memref<256x128xf32, #tpu.memory_space<vmem>>, %arg5: memref<1xf32, #tpu.memory_space<smem>>, %arg6: memref<256x128xbf16, #tpu.memory_space<vmem>>, %arg7: memref<256x128xf32, #tpu.memory_space<vmem>>, %arg8: memref<256x128xf32, #tpu.memory_space<vmem>>) attributes {dimension_semantics = [#tpu.dimension_semantics<parallel>, #tpu.dimension_semantics<arbitrary>], iteration_bounds = array<i64: 1, 1>, scalar_prefetch = 0 : i64, scratch_operands = 1 : i64, tpu.core_type = #tpu.core_type<tc>, window_params = [{transform_indices = @transform_0, window_bounds = array<i64: 256, 256>}, {pipeline_mode = #tpu.pipeline_mode<synchronous>, transform_indices = @transform_1, window_bounds = array<i64: 256, 128>}, {transform_indices = @transform_2, window_bounds = array<i64: 256, 128>}, {transform_indices = @transform_3, window_bounds = array<i64: 1>}, {transform_indices = @transform_4, window_bounds = array<i64: 256, 128>}, {transform_indices = @transform_5, window_bounds = array<i64: 256, 128>}]} {
    %c0_i32 = arith.constant 0 : i32
    %0 = arith.cmpi eq, %arg1, %c0_i32 : i32
    %1 = arith.extui %0 : i1 to i32
    %c0_i32_0 = arith.constant 0 : i32
    %2 = arith.cmpi ne, %1, %c0_i32_0 : i32
    scf.if %2 {
      %cst_9 = arith.constant 0.000000e+00 : f32
      %15 = vector.broadcast %cst_9 : f32 to vector<256x128xf32>
      %c0_10 = arith.constant 0 : index
      %c0_11 = arith.constant 0 : index
      %16 = vector.load %arg8[%c0_10, %c0_11] : memref<256x128xf32, #tpu.memory_space<vmem>>, vector<256x128xf32>
      tpu.vector_store %arg8[%c0_10, %c0_11], %15 {strides = array<i32>} : memref<256x128xf32, #tpu.memory_space<vmem>>, vector<256x128xf32>,
    } else {
    }
    %c256_i32 = arith.constant 256 : i32
    %3 = arith.muli %arg1, %c256_i32 : i32
    %4 = tpu.assume_multiple %3, 256 : i32
    %5 = arith.index_cast %4 : i32 to index
    %c0 = arith.constant 0 : index
    %6 = vector.load %arg3[%5, %c0] : memref<256x128xbf16, #tpu.memory_space<vmem>>, vector<256x128xbf16>
    %c0_1 = arith.constant 0 : index
    %c0_2 = arith.constant 0 : index
    %7 = vector.load %arg8[%c0_1, %c0_2] : memref<256x128xf32, #tpu.memory_space<vmem>>, vector<256x128xf32>
    %c0_3 = arith.constant 0 : index
    %c0_4 = arith.constant 0 : index
    %8 = vector.load %arg2[%c0_3, %c0_4] : memref<256x256xbf16, #tpu.memory_space<vmem>>, vector<256x256xbf16>
    %cst = arith.constant dense<0.000000e+00> : vector<256x128xf32>
    %9 = tpu.matmul %8, %6, %cst {dimension_numbers = #tpu.dot_dimension_numbers<[1], [0], [0], [1], [0, 0, 1, 1], [], []>} : vector<256x256xbf16>, vector<256x128xbf16>, vector<256x128xf32> -> vector<256x128xf32>
    %10 = arith.addf %7, %9 : vector<256x128xf32>
    %c0_5 = arith.constant 0 : index
    %c0_6 = arith.constant 0 : index
    %11 = vector.load %arg8[%c0_5, %c0_6] : memref<256x128xf32, #tpu.memory_space<vmem>>, vector<256x128xf32>
    tpu.vector_store %arg8[%c0_5, %c0_6], %10 {strides = array<i32>} : memref<256x128xf32, #tpu.memory_space<vmem>>, vector<256x128xf32>,
    %c0_i32_7 = arith.constant 0 : i32
    %12 = arith.cmpi eq, %arg1, %c0_i32_7 : i32
    %13 = arith.extui %12 : i1 to i32
    %c0_i32_8 = arith.constant 0 : i32
    %14 = arith.cmpi ne, %13, %c0_i32_8 : i32
    scf.if %14 {
      %c0_9 = arith.constant 0 : index
      %c0_10 = arith.constant 0 : index
      %15 = vector.load %arg8[%c0_9, %c0_10] : memref<256x128xf32, #tpu.memory_space<vmem>>, vector<256x128xf32>
      %16 = arith.truncf %15 : vector<256x128xf32> to vector<256x128xbf16>
      %c0_11 = arith.constant 0 : index
      %c0_12 = arith.constant 0 : index
      %17 = vector.load %arg6[%c0_11, %c0_12] : memref<256x128xbf16, #tpu.memory_space<vmem>>, vector<256x128xbf16>
      tpu.vector_store %arg6[%c0_11, %c0_12], %16 {strides = array<i32>} : memref<256x128xbf16, #tpu.memory_space<vmem>>, vector<256x128xbf16>,
      %c0_13 = arith.constant 0 : index
      %c0_14 = arith.constant 0 : index
      %18 = vector.load %arg4[%c0_13, %c0_14] : memref<256x128xf32, #tpu.memory_space<vmem>>, vector<256x128xf32>
      %c0_15 = arith.constant 0 : index
      %19 = memref.load %arg5[%c0_15] : memref<1xf32, #tpu.memory_space<smem>>
      %20 = vector.broadcast %19 : f32 to vector<256x128xf32>
      %21 = arith.mulf %20, %15 : vector<256x128xf32>
      %22 = arith.addf %18, %21 : vector<256x128xf32>
      %c0_16 = arith.constant 0 : index
      %c0_17 = arith.constant 0 : index
      %23 = vector.load %arg7[%c0_16, %c0_17] : memref<256x128xf32, #tpu.memory_space<vmem>>, vector<256x128xf32>
      tpu.vector_store %arg7[%c0_16, %c0_17], %22 {strides = array<i32>} : memref<256x128xf32, #tpu.memory_space<vmem>>, vector<256x128xf32>,
    } else {
    }
    return
  }
  func.func @transform_0(%arg0: i32, %arg1: i32) -> (i32, i32) {
    %c0_i32 = arith.constant 0 : i32
    return %arg0, %arg1 : i32, i32
  }
  func.func @transform_1(%arg0: i32, %arg1: i32) -> (i32, i32) {
    %c0_i32 = arith.constant 0 : i32
    %c0_i32_0 = arith.constant 0 : i32
    %c0_i32_1 = arith.constant 0 : i32
    return %c0_i32, %c0_i32_0 : i32, i32
  }
  func.func @transform_2(%arg0: i32, %arg1: i32) -> (i32, i32) {
    %c0_i32 = arith.constant 0 : i32
    %c0_i32_0 = arith.constant 0 : i32
    return %arg0, %c0_i32 : i32, i32
  }
  func.func @transform_3(%arg0: i32, %arg1: i32) -> i32 {
    %c0_i32 = arith.constant 0 : i32
    %c0_i32_0 = arith.constant 0 : i32
    return %c0_i32 : i32
  }
  func.func @transform_4(%arg0: i32, %arg1: i32) -> (i32, i32) {
    %c0_i32 = arith.constant 0 : i32
    %c0_i32_0 = arith.constant 0 : i32
    return %arg0, %c0_i32 : i32, i32
  }
  func.func @transform_5(%arg0: i32, %arg1: i32) -> (i32, i32) {
    %c0_i32 = arith.constant 0 : i32
    %c0_i32_0 = arith.constant 0 : i32
    return %arg0, %c0_i32 : i32, i32
  }
}

module attributes {stable_mosaic.version = 11 : i64} {
  func.func @_item_norm_kernel(%arg0: i32, %arg1: memref<256x128xf32, #tpu.memory_space<vmem>>, %arg2: memref<256x128xf32, #tpu.memory_space<vmem>>) attributes {dimension_semantics = [#tpu.dimension_semantics<parallel>], iteration_bounds = array<i64: 1>, scalar_prefetch = 0 : i64, scratch_operands = 0 : i64, tpu.core_type = #tpu.core_type<tc>, window_params = [{transform_indices = @transform_0, window_bounds = array<i64: 256, 128>}, {transform_indices = @transform_1, window_bounds = array<i64: 256, 128>}]} {
    %c256_i32 = arith.constant 256 : i32
    %0 = arith.muli %arg0, %c256_i32 : i32
    %c0 = arith.constant 0 : index
    %c0_0 = arith.constant 0 : index
    %1 = vector.load %arg1[%c0, %c0_0] : memref<256x128xf32, #tpu.memory_space<vmem>>, vector<256x128xf32>
    %2 = tpu.iota {dimensions = array<i32: 0>} : vector<256x128xi32>
    %3 = vector.broadcast %0 : i32 to vector<256x128xi32>
    %4 = arith.addi %2, %3 : vector<256x128xi32>
    %5 = arith.mulf %1, %1 : vector<256x128xf32>
    %cst = arith.constant dense<0.000000e+00> : vector<256xf32>
    %6 = vector.multi_reduction <add>, %5, %cst [1] : vector<256x128xf32> to vector<256xf32>
    %7 = vector.shape_cast %6 : vector<256xf32> to vector<256x1xf32>
    %cst_1 = arith.constant 1.000000e-24 : f32
    %8 = vector.broadcast %cst_1 : f32 to vector<256x1xf32>
    %9 = arith.maximumf %7, %8 : vector<256x1xf32>
    %10 = math.rsqrt %9 : vector<256x1xf32>
    %cst_2 = arith.constant 1.500000e+00 : f32
    %11 = vector.broadcast %cst_2 : f32 to vector<256x1xf32>
    %12 = arith.mulf %10, %11 : vector<256x1xf32>
    %c8_i32 = arith.constant 8 : i32
    %13 = vector.broadcast %c8_i32 : i32 to vector<256x128xi32>
    %14 = arith.cmpi sge, %4, %13 : vector<256x128xi32>
    %15 = vector.broadcast %12 : vector<256x1xf32> to vector<256x128xf32>
    %16 = arith.mulf %1, %15 : vector<256x128xf32>
    %17 = arith.select %14, %16, %1 : vector<256x128xi1>, vector<256x128xf32>
    %c0_3 = arith.constant 0 : index
    %c0_4 = arith.constant 0 : index
    %18 = vector.load %arg2[%c0_3, %c0_4] : memref<256x128xf32, #tpu.memory_space<vmem>>, vector<256x128xf32>
    tpu.vector_store %arg2[%c0_3, %c0_4], %17 {strides = array<i32>} : memref<256x128xf32, #tpu.memory_space<vmem>>, vector<256x128xf32>,
    return
  }
  func.func @transform_0(%arg0: i32) -> (i32, i32) {
    %c0_i32 = arith.constant 0 : i32
    %c0_i32_0 = arith.constant 0 : i32
    return %arg0, %c0_i32 : i32, i32
  }
  func.func @transform_1(%arg0: i32) -> (i32, i32) {
    %c0_i32 = arith.constant 0 : i32
    %c0_i32_0 = arith.constant 0 : i32
    return %arg0, %c0_i32 : i32, i32
  }
}

module attributes {stable_mosaic.version = 11 : i64} {
  func.func @_lgconv_layer_kernel(%arg0: i32, %arg1: i32, %arg2: memref<256x256xbf16, #tpu.memory_space<vmem>>, %arg3: memref<256x128xbf16, #tpu.memory_space<vmem>>, %arg4: memref<256x128xf32, #tpu.memory_space<vmem>>, %arg5: memref<1xf32, #tpu.memory_space<smem>>, %arg6: memref<256x128xbf16, #tpu.memory_space<vmem>>, %arg7: memref<256x128xf32, #tpu.memory_space<vmem>>, %arg8: memref<256x128xf32, #tpu.memory_space<vmem>>) attributes {dimension_semantics = [#tpu.dimension_semantics<parallel>, #tpu.dimension_semantics<arbitrary>], iteration_bounds = array<i64: 1, 1>, scalar_prefetch = 0 : i64, scratch_operands = 1 : i64, tpu.core_type = #tpu.core_type<tc>, window_params = [{transform_indices = @transform_0, window_bounds = array<i64: 256, 256>}, {pipeline_mode = #tpu.pipeline_mode<synchronous>, transform_indices = @transform_1, window_bounds = array<i64: 256, 128>}, {transform_indices = @transform_2, window_bounds = array<i64: 256, 128>}, {transform_indices = @transform_3, window_bounds = array<i64: 1>}, {transform_indices = @transform_4, window_bounds = array<i64: 256, 128>}, {transform_indices = @transform_5, window_bounds = array<i64: 256, 128>}]} {
    %c0_i32 = arith.constant 0 : i32
    %0 = arith.cmpi eq, %arg1, %c0_i32 : i32
    %1 = arith.extui %0 : i1 to i32
    %c0_i32_0 = arith.constant 0 : i32
    %2 = arith.cmpi ne, %1, %c0_i32_0 : i32
    scf.if %2 {
      %cst_9 = arith.constant 0.000000e+00 : f32
      %15 = vector.broadcast %cst_9 : f32 to vector<256x128xf32>
      %c0_10 = arith.constant 0 : index
      %c0_11 = arith.constant 0 : index
      %16 = vector.load %arg8[%c0_10, %c0_11] : memref<256x128xf32, #tpu.memory_space<vmem>>, vector<256x128xf32>
      tpu.vector_store %arg8[%c0_10, %c0_11], %15 {strides = array<i32>} : memref<256x128xf32, #tpu.memory_space<vmem>>, vector<256x128xf32>,
    } else {
    }
    %c256_i32 = arith.constant 256 : i32
    %3 = arith.muli %arg1, %c256_i32 : i32
    %4 = tpu.assume_multiple %3, 256 : i32
    %5 = arith.index_cast %4 : i32 to index
    %c0 = arith.constant 0 : index
    %6 = vector.load %arg3[%5, %c0] : memref<256x128xbf16, #tpu.memory_space<vmem>>, vector<256x128xbf16>
    %c0_1 = arith.constant 0 : index
    %c0_2 = arith.constant 0 : index
    %7 = vector.load %arg8[%c0_1, %c0_2] : memref<256x128xf32, #tpu.memory_space<vmem>>, vector<256x128xf32>
    %c0_3 = arith.constant 0 : index
    %c0_4 = arith.constant 0 : index
    %8 = vector.load %arg2[%c0_3, %c0_4] : memref<256x256xbf16, #tpu.memory_space<vmem>>, vector<256x256xbf16>
    %cst = arith.constant dense<0.000000e+00> : vector<256x128xf32>
    %9 = tpu.matmul %8, %6, %cst {dimension_numbers = #tpu.dot_dimension_numbers<[1], [0], [0], [1], [0, 0, 1, 1], [], []>} : vector<256x256xbf16>, vector<256x128xbf16>, vector<256x128xf32> -> vector<256x128xf32>
    %10 = arith.addf %7, %9 : vector<256x128xf32>
    %c0_5 = arith.constant 0 : index
    %c0_6 = arith.constant 0 : index
    %11 = vector.load %arg8[%c0_5, %c0_6] : memref<256x128xf32, #tpu.memory_space<vmem>>, vector<256x128xf32>
    tpu.vector_store %arg8[%c0_5, %c0_6], %10 {strides = array<i32>} : memref<256x128xf32, #tpu.memory_space<vmem>>, vector<256x128xf32>,
    %c0_i32_7 = arith.constant 0 : i32
    %12 = arith.cmpi eq, %arg1, %c0_i32_7 : i32
    %13 = arith.extui %12 : i1 to i32
    %c0_i32_8 = arith.constant 0 : i32
    %14 = arith.cmpi ne, %13, %c0_i32_8 : i32
    scf.if %14 {
      %c0_9 = arith.constant 0 : index
      %c0_10 = arith.constant 0 : index
      %15 = vector.load %arg8[%c0_9, %c0_10] : memref<256x128xf32, #tpu.memory_space<vmem>>, vector<256x128xf32>
      %16 = arith.truncf %15 : vector<256x128xf32> to vector<256x128xbf16>
      %c0_11 = arith.constant 0 : index
      %c0_12 = arith.constant 0 : index
      %17 = vector.load %arg6[%c0_11, %c0_12] : memref<256x128xbf16, #tpu.memory_space<vmem>>, vector<256x128xbf16>
      tpu.vector_store %arg6[%c0_11, %c0_12], %16 {strides = array<i32>} : memref<256x128xbf16, #tpu.memory_space<vmem>>, vector<256x128xbf16>,
      %c0_13 = arith.constant 0 : index
      %c0_14 = arith.constant 0 : index
      %18 = vector.load %arg4[%c0_13, %c0_14] : memref<256x128xf32, #tpu.memory_space<vmem>>, vector<256x128xf32>
      %c0_15 = arith.constant 0 : index
      %19 = memref.load %arg5[%c0_15] : memref<1xf32, #tpu.memory_space<smem>>
      %20 = vector.broadcast %19 : f32 to vector<256x128xf32>
      %21 = arith.mulf %20, %15 : vector<256x128xf32>
      %22 = arith.addf %18, %21 : vector<256x128xf32>
      %c0_16 = arith.constant 0 : index
      %c0_17 = arith.constant 0 : index
      %23 = vector.load %arg7[%c0_16, %c0_17] : memref<256x128xf32, #tpu.memory_space<vmem>>, vector<256x128xf32>
      tpu.vector_store %arg7[%c0_16, %c0_17], %22 {strides = array<i32>} : memref<256x128xf32, #tpu.memory_space<vmem>>, vector<256x128xf32>,
    } else {
    }
    return
  }
  func.func @transform_0(%arg0: i32, %arg1: i32) -> (i32, i32) {
    %c0_i32 = arith.constant 0 : i32
    return %arg0, %arg1 : i32, i32
  }
  func.func @transform_1(%arg0: i32, %arg1: i32) -> (i32, i32) {
    %c0_i32 = arith.constant 0 : i32
    %c0_i32_0 = arith.constant 0 : i32
    %c0_i32_1 = arith.constant 0 : i32
    return %c0_i32, %c0_i32_0 : i32, i32
  }
  func.func @transform_2(%arg0: i32, %arg1: i32) -> (i32, i32) {
    %c0_i32 = arith.constant 0 : i32
    %c0_i32_0 = arith.constant 0 : i32
    return %arg0, %c0_i32 : i32, i32
  }
  func.func @transform_3(%arg0: i32, %arg1: i32) -> i32 {
    %c0_i32 = arith.constant 0 : i32
    %c0_i32_0 = arith.constant 0 : i32
    return %c0_i32 : i32
  }
  func.func @transform_4(%arg0: i32, %arg1: i32) -> (i32, i32) {
    %c0_i32 = arith.constant 0 : i32
    %c0_i32_0 = arith.constant 0 : i32
    return %arg0, %c0_i32 : i32, i32
  }
  func.func @transform_5(%arg0: i32, %arg1: i32) -> (i32, i32) {
    %c0_i32 = arith.constant 0 : i32
    %c0_i32_0 = arith.constant 0 : i32
    return %arg0, %c0_i32 : i32, i32
  }
}

module attributes {stable_mosaic.version = 11 : i64} {
  func.func @_score_kernel(%arg0: i32, %arg1: memref<32x16xf32, #tpu.memory_space<vmem>>, %arg2: memref<32x16xf32, #tpu.memory_space<vmem>>, %arg3: memref<8x1xf32, #tpu.memory_space<vmem>>, %arg4: memref<8x1xf32, #tpu.memory_space<vmem>>, %arg5: memref<8x8xf32, #tpu.memory_space<vmem>>, %arg6: memref<8x8xf32, #tpu.memory_space<vmem>>) attributes {dimension_semantics = [#tpu.dimension_semantics<arbitrary>], iteration_bounds = array<i64: 1>, scalar_prefetch = 0 : i64, scratch_operands = 0 : i64, tpu.core_type = #tpu.core_type<tc>, window_params = [{pipeline_mode = #tpu.pipeline_mode<synchronous>, transform_indices = @transform_0, window_bounds = array<i64: 32, 16>}, {pipeline_mode = #tpu.pipeline_mode<synchronous>, transform_indices = @transform_1, window_bounds = array<i64: 32, 16>}, {pipeline_mode = #tpu.pipeline_mode<synchronous>, transform_indices = @transform_2, window_bounds = array<i64: 8, 1>}, {pipeline_mode = #tpu.pipeline_mode<synchronous>, transform_indices = @transform_3, window_bounds = array<i64: 8, 1>}, {pipeline_mode = #tpu.pipeline_mode<synchronous>, transform_indices = @transform_4, window_bounds = array<i64: 8, 8>}, {pipeline_mode = #tpu.pipeline_mode<synchronous>, transform_indices = @transform_5, window_bounds = array<i64: 8, 8>}]} {
    %c0 = arith.constant 0 : index
    %c0_0 = arith.constant 0 : index
    %0 = vector.load %arg1[%c0, %c0_0] : memref<32x16xf32, #tpu.memory_space<vmem>>, vector<32x16xf32>
    %c0_1 = arith.constant 0 : index
    %c0_2 = arith.constant 0 : index
    %1 = vector.load %arg2[%c0_1, %c0_2] : memref<32x16xf32, #tpu.memory_space<vmem>>, vector<32x16xf32>
    %2 = arith.mulf %0, %1 : vector<32x16xf32>
    %cst = arith.constant dense<0.000000e+00> : vector<16xf32>
    %3 = vector.multi_reduction <add>, %2, %cst [0] : vector<32x16xf32> to vector<16xf32>
    %4 = vector.shape_cast %3 : vector<16xf32> to vector<1x16xf32>
    %c0_3 = arith.constant 0 : index
    %c0_4 = arith.constant 0 : index
    %5 = vector.load %arg3[%c0_3, %c0_4] : memref<8x1xf32, #tpu.memory_space<vmem>>, vector<8x1xf32>
    %6 = vector.extract_strided_slice %4 {offsets = [0, 0], sizes = [1, 8], strides = [1, 1]} : vector<1x16xf32> to vector<1x8xf32>
    %7 = vector.broadcast %5 : vector<8x1xf32> to vector<8x8xf32>
    %8 = vector.broadcast %6 : vector<1x8xf32> to vector<8x8xf32>
    %9 = arith.addf %7, %8 : vector<8x8xf32>
    %c0_5 = arith.constant 0 : index
    %c0_6 = arith.constant 0 : index
    %10 = vector.load %arg5[%c0_5, %c0_6] : memref<8x8xf32, #tpu.memory_space<vmem>>, vector<8x8xf32>
    tpu.vector_store %arg5[%c0_5, %c0_6], %9 {strides = array<i32>} : memref<8x8xf32, #tpu.memory_space<vmem>>, vector<8x8xf32>,
    %c0_7 = arith.constant 0 : index
    %c0_8 = arith.constant 0 : index
    %11 = vector.load %arg4[%c0_7, %c0_8] : memref<8x1xf32, #tpu.memory_space<vmem>>, vector<8x1xf32>
    %12 = vector.extract_strided_slice %4 {offsets = [0, 8], sizes = [1, 8], strides = [1, 1]} : vector<1x16xf32> to vector<1x8xf32>
    %13 = vector.broadcast %11 : vector<8x1xf32> to vector<8x8xf32>
    %14 = vector.broadcast %12 : vector<1x8xf32> to vector<8x8xf32>
    %15 = arith.addf %13, %14 : vector<8x8xf32>
    %c0_9 = arith.constant 0 : index
    %c0_10 = arith.constant 0 : index
    %16 = vector.load %arg6[%c0_9, %c0_10] : memref<8x8xf32, #tpu.memory_space<vmem>>, vector<8x8xf32>
    tpu.vector_store %arg6[%c0_9, %c0_10], %15 {strides = array<i32>} : memref<8x8xf32, #tpu.memory_space<vmem>>, vector<8x8xf32>,
    return
  }
  func.func @transform_0(%arg0: i32) -> (i32, i32) {
    %c0_i32 = arith.constant 0 : i32
    %c0_i32_0 = arith.constant 0 : i32
    %c0_i32_1 = arith.constant 0 : i32
    return %c0_i32, %c0_i32_0 : i32, i32
  }
  func.func @transform_1(%arg0: i32) -> (i32, i32) {
    %c0_i32 = arith.constant 0 : i32
    %c0_i32_0 = arith.constant 0 : i32
    %c0_i32_1 = arith.constant 0 : i32
    return %c0_i32, %c0_i32_0 : i32, i32
  }
  func.func @transform_2(%arg0: i32) -> (i32, i32) {
    %c0_i32 = arith.constant 0 : i32
    %c0_i32_0 = arith.constant 0 : i32
    %c0_i32_1 = arith.constant 0 : i32
    return %c0_i32, %c0_i32_0 : i32, i32
  }
  func.func @transform_3(%arg0: i32) -> (i32, i32) {
    %c0_i32 = arith.constant 0 : i32
    %c0_i32_0 = arith.constant 0 : i32
    %c0_i32_1 = arith.constant 0 : i32
    return %c0_i32, %c0_i32_0 : i32, i32
  }
  func.func @transform_4(%arg0: i32) -> (i32, i32) {
    %c0_i32 = arith.constant 0 : i32
    %c0_i32_0 = arith.constant 0 : i32
    %c0_i32_1 = arith.constant 0 : i32
    return %c0_i32, %c0_i32_0 : i32, i32
  }
  func.func @transform_5(%arg0: i32) -> (i32, i32) {
    %c0_i32 = arith.constant 0 : i32
    %c0_i32_0 = arith.constant 0 : i32
    %c0_i32_1 = arith.constant 0 : i32
    return %c0_i32, %c0_i32_0 : i32, i32
  }
}

</mosaic_0001>

<llo_original>
// kernel: aim_lightgcn_forward.6
$region0: #{aim_lightgcn_forward.6}
  #allocation0 [shape = 'u32[]', space=smem, size = 0x4, offset = 0x4, fixed_abs, tag = 'smem constant byte address 0x4 - core index']
  #allocation1 [shape = 'u32[144,128]{1,0:T(1,128)}', space=vmem, size = 0x12000, scoped, tag = 'internal scratch']
  %s0 = inlined_call_operand.vmem [shape: f32[256,128], index: 0, kind: input, shape index: {}]
  %s1 = inlined_call_operand.vmem [shape: f32[256,128], index: 1, kind: output, shape index: {}]
  %s2 = sld [smem:[#allocation0]]
  $region14: #{aim_lightgcn_forward.6} parent=0
    _
  %s4 = ssub.s32 1, %s2
  %s5 = scalar_select 0, %s4, %s2
  // Predicated region
  $region2: #{aim_lightgcn_forward.6} parent=0 // pred_check
    _
  $region3: #{aim_lightgcn_forward.6} parent=0 // pred_check_branch
    %7 = sbr.rel (0) target = $region5
  $region4: #{aim_lightgcn_forward.6} parent=0 // pred_region
    _
  $region5: #{aim_lightgcn_forward.6} parent=0 // pred_fallthru
    _
  %s8 = smul.u32 0, 256
  %v9 = vld [vmem:[%s0] sm:$0xff]
  %v10 = vld [vmem:[%s0 + $0x8] sm:$0xff]
  %v11 = vld [vmem:[%s0 + $0x10] sm:$0xff]
  %v12 = vld [vmem:[%s0 + $0x18] sm:$0xff]
  %v13 = vld [vmem:[%s0 + $0x20] sm:$0xff]
  %v14 = vld [vmem:[%s0 + $0x28] sm:$0xff]
  %v15 = vld [vmem:[%s0 + $0x30] sm:$0xff]
  %v16 = vld [vmem:[%s0 + $0x38] sm:$0xff]
  %v17 = vld [vmem:[%s0 + $0x40] sm:$0xff]
  %v18 = vld [vmem:[%s0 + $0x48] sm:$0xff]
  %v19 = vld [vmem:[%s0 + $0x50] sm:$0xff]
  %v20 = vld [vmem:[%s0 + $0x58] sm:$0xff]
  %v21 = vld [vmem:[%s0 + $0x60] sm:$0xff]
  %v22 = vld [vmem:[%s0 + $0x68] sm:$0xff]
  %v23 = vld [vmem:[%s0 + $0x70] sm:$0xff]
  %v24 = vld [vmem:[%s0 + $0x78] sm:$0xff]
  %v25 = vld [vmem:[%s0 + $0x80] sm:$0xff]
  %v26 = vld [vmem:[%s0 + $0x88] sm:$0xff]
  %v27 = vld [vmem:[%s0 + $0x90] sm:$0xff]
  %v28 = vld [vmem:[%s0 + $0x98] sm:$0xff]
  %v29 = vld [vmem:[%s0 + $0xa0] sm:$0xff]
  %v30 = vld [vmem:[%s0 + $0xa8] sm:$0xff]
  %v31 = vld [vmem:[%s0 + $0xb0] sm:$0xff]
  %v32 = vld [vmem:[%s0 + $0xb8] sm:$0xff]
  %v33 = vld [vmem:[%s0 + $0xc0] sm:$0xff]
  %v34 = vld [vmem:[%s0 + $0xc8] sm:$0xff]
  %v35 = vld [vmem:[%s0 + $0xd0] sm:$0xff]
  %v36 = vld [vmem:[%s0 + $0xd8] sm:$0xff]
  %v37 = vld [vmem:[%s0 + $0xe0] sm:$0xff]
  %v38 = vld [vmem:[%s0 + $0xe8] sm:$0xff]
  %v39 = vld [vmem:[%s0 + $0xf0] sm:$0xff]
  %v40 = vld [vmem:[%s0 + $0xf8] sm:$0xff]
  %v41 = vlaneseq
  %v42 = vshrl.u32 %v41, 7
  %v43 = vadd.s32 %v42, 8
  %v44 = vadd.s32 %v42, 16
  %v45 = vadd.s32 %v42, 24
  %v46 = vadd.s32 %v42, 32
  %v47 = vadd.s32 %v42, 40
  %v48 = vadd.s32 %v42, 48
  %v49 = vadd.s32 %v42, 56
  %v50 = vadd.s32 %v42, 64
  %v51 = vadd.s32 %v42, 72
  %v52 = vadd.s32 %v42, 80
  %v53 = vadd.s32 %v42, 88
  %v54 = vadd.s32 %v42, 96
  %v55 = vadd.s32 %v42, 104
  %v56 = vadd.s32 %v42, 112
  %v57 = vadd.s32 %v42, 120
  %v58 = vadd.s32 %v42, 128
  %v59 = vadd.s32 %v42, 136
  %v60 = vadd.s32 %v42, 144
  %v61 = vadd.s32 %v42, 152
  %v62 = vadd.s32 %v42, 160
  %v63 = vadd.s32 %v42, 168
  %v64 = vadd.s32 %v42, 176
  %v65 = vadd.s32 %v42, 184
  %v66 = vadd.s32 %v42, 192
  %v67 = vadd.s32 %v42, 200
  %v68 = vadd.s32 %v42, 208
  %v69 = vadd.s32 %v42, 216
  %v70 = vadd.s32 %v42, 224
  %v71 = vadd.s32 %v42, 232
  %v72 = vadd.s32 %v42, 240
  %v73 = vadd.s32 %v42, 248
  %v74 = vstv %s8
  %v75 = vadd.s32 %v42, %v74
  %v76 = vadd.s32 %v43, %v74
  %v77 = vadd.s32 %v44, %v74
  %v78 = vadd.s32 %v45, %v74
  %v79 = vadd.s32 %v46, %v74
  %v80 = vadd.s32 %v47, %v74
  %v81 = vadd.s32 %v48, %v74
  %v82 = vadd.s32 %v49, %v74
  %v83 = vadd.s32 %v50, %v74
  %v84 = vadd.s32 %v51, %v74
  %v85 = vadd.s32 %v52, %v74
  %v86 = vadd.s32 %v53, %v74
  %v87 = vadd.s32 %v54, %v74
  %v88 = vadd.s32 %v55, %v74
  %v89 = vadd.s32 %v56, %v74
  %v90 = vadd.s32 %v57, %v74
  %v91 = vadd.s32 %v58, %v74
  %v92 = vadd.s32 %v59, %v74
  %v93 = vadd.s32 %v60, %v74
  %v94 = vadd.s32 %v61, %v74
  %v95 = vadd.s32 %v62, %v74
  %v96 = vadd.s32 %v63, %v74
  %v97 = vadd.s32 %v64, %v74
  %v98 = vadd.s32 %v65, %v74
  %v99 = vadd.s32 %v66, %v74
  %v100 = vadd.s32 %v67, %v74
  %v101 = vadd.s32 %v68, %v74
  %v102 = vadd.s32 %v69, %v74
  %v103 = vadd.s32 %v70, %v74
  %v104 = vadd.s32 %v71, %v74
  %v105 = vadd.s32 %v72, %v74
  %v106 = vadd.s32 %v73, %v74
  %v107 = vmul.f32 %v9, %v9
  %v108 = vmul.f32 %v10, %v10
  %v109 = vmul.f32 %v11, %v11
  %v110 = vmul.f32 %v12, %v12
  %v111 = vmul.f32 %v13, %v13
  %v112 = vmul.f32 %v14, %v14
  %v113 = vmul.f32 %v15, %v15
  %v114 = vmul.f32 %v16, %v16
  %v115 = vmul.f32 %v17, %v17
  %v116 = vmul.f32 %v18, %v18
  %v117 = vmul.f32 %v19, %v19
  %v118 = vmul.f32 %v20, %v20
  %v119 = vmul.f32 %v21, %v21
  %v120 = vmul.f32 %v22, %v22
  %v121 = vmul.f32 %v23, %v23
  %v122 = vmul.f32 %v24, %v24
  %v123 = vmul.f32 %v25, %v25
  %v124 = vmul.f32 %v26, %v26
  %v125 = vmul.f32 %v27, %v27
  %v126 = vmul.f32 %v28, %v28
  %v127 = vmul.f32 %v29, %v29
  %v128 = vmul.f32 %v30, %v30
  %v129 = vmul.f32 %v31, %v31
  %v130 = vmul.f32 %v32, %v32
  %v131 = vmul.f32 %v33, %v33
  %v132 = vmul.f32 %v34, %v34
  %v133 = vmul.f32 %v35, %v35
  %v134 = vmul.f32 %v36, %v36
  %v135 = vmul.f32 %v37, %v37
  %v136 = vmul.f32 %v38, %v38
  %v137 = vmul.f32 %v39, %v39
  %v138 = vmul.f32 %v40, %v40
  %139 = vadd.xlane.f32.xlu0 %v107
  %v140 = vpop.xlane.xlu0 %139
  %141 = vadd.xlane.f32.xlu0 %v108
  %v142 = vpop.xlane.xlu0 %141
  %143 = vadd.xlane.f32.xlu0 %v109
  %v144 = vpop.xlane.xlu0 %143
  %145 = vadd.xlane.f32.xlu0 %v110
  %v146 = vpop.xlane.xlu0 %145
  %147 = vadd.xlane.f32.xlu0 %v111
  %v148 = vpop.xlane.xlu0 %147
  %149 = vadd.xlane.f32.xlu0 %v112
  %v150 = vpop.xlane.xlu0 %149
  %151 = vadd.xlane.f32.xlu0 %v113
  %v152 = vpop.xlane.xlu0 %151
  %153 = vadd.xlane.f32.xlu0 %v114
  %v154 = vpop.xlane.xlu0 %153
  %155 = vadd.xlane.f32.xlu0 %v115
  %v156 = vpop.xlane.xlu0 %155
  %157 = vadd.xlane.f32.xlu0 %v116
  %v158 = vpop.xlane.xlu0 %157
  %159 = vadd.xlane.f32.xlu0 %v117
  %v160 = vpop.xlane.xlu0 %159
  %161 = vadd.xlane.f32.xlu0 %v118
  %v162 = vpop.xlane.xlu0 %161
  %163 = vadd.xlane.f32.xlu0 %v119
  %v164 = vpop.xlane.xlu0 %163
  %165 = vadd.xlane.f32.xlu0 %v120
  %v166 = vpop.xlane.xlu0 %165
  %167 = vadd.xlane.f32.xlu0 %v121
  %v168 = vpop.xlane.xlu0 %167
  %169 = vadd.xlane.f32.xlu0 %v122
  %v170 = vpop.xlane.xlu0 %169
  %171 = vadd.xlane.f32.xlu0 %v123
  %v172 = vpop.xlane.xlu0 %171
  %173 = vadd.xlane.f32.xlu0 %v124
  %v174 = vpop.xlane.xlu0 %173
  %175 = vadd.xlane.f32.xlu0 %v125
  %v176 = vpop.xlane.xlu0 %175
  %177 = vadd.xlane.f32.xlu0 %v126
  %v178 = vpop.xlane.xlu0 %177
  %179 = vadd.xlane.f32.xlu0 %v127
  %v180 = vpop.xlane.xlu0 %179
  %181 = vadd.xlane.f32.xlu0 %v128
  %v182 = vpop.xlane.xlu0 %181
  %183 = vadd.xlane.f32.xlu0 %v129
  %v184 = vpop.xlane.xlu0 %183
  %185 = vadd.xlane.f32.xlu0 %v130
  %v186 = vpop.xlane.xlu0 %185
  %187 = vadd.xlane.f32.xlu0 %v131
  %v188 = vpop.xlane.xlu0 %187
  %189 = vadd.xlane.f32.xlu0 %v132
  %v190 = vpop.xlane.xlu0 %189
  %191 = vadd.xlane.f32.xlu0 %v133
  %v192 = vpop.xlane.xlu0 %191
  %193 = vadd.xlane.f32.xlu0 %v134
  %v194 = vpop.xlane.xlu0 %193
  %195 = vadd.xlane.f32.xlu0 %v135
  %v196 = vpop.xlane.xlu0 %195
  %197 = vadd.xlane.f32.xlu0 %v136
  %v198 = vpop.xlane.xlu0 %197
  %199 = vadd.xlane.f32.xlu0 %v137
  %v200 = vpop.xlane.xlu0 %199
  %201 = vadd.xlane.f32.xlu0 %v138
  %v202 = vpop.xlane.xlu0 %201
  %v203 = vmax.f32 %v140, 1e-24
  %v204 = vmax.f32 %v142, 1e-24
  %v205 = vmax.f32 %v144, 1e-24
  %v206 = vmax.f32 %v146, 1e-24
  %v207 = vmax.f32 %v148, 1e-24
  %v208 = vmax.f32 %v150, 1e-24
  %v209 = vmax.f32 %v152, 1e-24
  %v210 = vmax.f32 %v154, 1e-24
  %v211 = vmax.f32 %v156, 1e-24
  %v212 = vmax.f32 %v158, 1e-24
  %v213 = vmax.f32 %v160, 1e-24
  %v214 = vmax.f32 %v162, 1e-24
  %v215 = vmax.f32 %v164, 1e-24
  %v216 = vmax.f32 %v166, 1e-24
  %v217 = vmax.f32 %v168, 1e-24
  %v218 = vmax.f32 %v170, 1e-24
  %v219 = vmax.f32 %v172, 1e-24
  %v220 = vmax.f32 %v174, 1e-24
  %v221 = vmax.f32 %v176, 1e-24
  %v222 = vmax.f32 %v178, 1e-24
  %v223 = vmax.f32 %v180, 1e-24
  %v224 = vmax.f32 %v182, 1e-24
  %v225 = vmax.f32 %v184, 1e-24
  %v226 = vmax.f32 %v186, 1e-24
  %v227 = vmax.f32 %v188, 1e-24
  %v228 = vmax.f32 %v190, 1e-24
  %v229 = vmax.f32 %v192, 1e-24
  %v230 = vmax.f32 %v194, 1e-24
  %v231 = vmax.f32 %v196, 1e-24
  %v232 = vmax.f32 %v198, 1e-24
  %v233 = vmax.f32 %v200, 1e-24
  %v234 = vmax.f32 %v202, 1e-24
  %v235 = vrsqrt.pop %v203
  %v236 = vrsqrt.pop %v204
  %v237 = vrsqrt.pop %v205
  %v238 = vrsqrt.pop %v206
  %v239 = vrsqrt.pop %v207
  %v240 = vrsqrt.pop %v208
  %v241 = vrsqrt.pop %v209
  %v242 = vrsqrt.pop %v210
  %v243 = vrsqrt.pop %v211
  %v244 = vrsqrt.pop %v212
  %v245 = vrsqrt.pop %v213
  %v246 = vrsqrt.pop %v214
  %v247 = vrsqrt.pop %v215
  %v248 = vrsqrt.pop %v216
  %v249 = vrsqrt.pop %v217
  %v250 = vrsqrt.pop %v218
  %v251 = vrsqrt.pop %v219
  %v252 = vrsqrt.pop %v220
  %v253 = vrsqrt.pop %v221
  %v254 = vrsqrt.pop %v222
  %v255 = vrsqrt.pop %v223
  %v256 = vrsqrt.pop %v224
  %v257 = vrsqrt.pop %v225
  %v258 = vrsqrt.pop %v226
  %v259 = vrsqrt.pop %v227
  %v260 = vrsqrt.pop %v228
  %v261 = vrsqrt.pop %v229
  %v262 = vrsqrt.pop %v230
  %v263 = vrsqrt.pop %v231
  %v264 = vrsqrt.pop %v232
  %v265 = vrsqrt.pop %v233
  %v266 = vrsqrt.pop %v234
  %v267 = vmul.f32 %v235, 1.5
  %v268 = vmul.f32 %v236, 1.5
  %v269 = vmul.f32 %v237, 1.5
  %v270 = vmul.f32 %v238, 1.5
  %v271 = vmul.f32 %v239, 1.5
  %v272 = vmul.f32 %v240, 1.5
  %v273 = vmul.f32 %v241, 1.5
  %v274 = vmul.f32 %v242, 1.5
  %v275 = vmul.f32 %v243, 1.5
  %v276 = vmul.f32 %v244, 1.5
  %v277 = vmul.f32 %v245, 1.5
  %v278 = vmul.f32 %v246, 1.5
  %v279 = vmul.f32 %v247, 1.5
  %v280 = vmul.f32 %v248, 1.5
  %v281 = vmul.f32 %v249, 1.5
  %v282 = vmul.f32 %v250, 1.5
  %v283 = vmul.f32 %v251, 1.5
  %v284 = vmul.f32 %v252, 1.5
  %v285 = vmul.f32 %v253, 1.5
  %v286 = vmul.f32 %v254, 1.5
  %v287 = vmul.f32 %v255, 1.5
  %v288 = vmul.f32 %v256, 1.5
  %v289 = vmul.f32 %v257, 1.5
  %v290 = vmul.f32 %v258, 1.5
  %v291 = vmul.f32 %v259, 1.5
  %v292 = vmul.f32 %v260, 1.5
  %v293 = vmul.f32 %v261, 1.5
  %v294 = vmul.f32 %v262, 1.5
  %v295 = vmul.f32 %v263, 1.5
  %v296 = vmul.f32 %v264, 1.5
  %v297 = vmul.f32 %v265, 1.5
  %v298 = vmul.f32 %v266, 1.5
  %vm299 = vcmp.ge.s32.totalorder %v75, 8
  %vm300 = vcmp.ge.s32.totalorder %v76, 8
  %vm301 = vcmp.ge.s32.totalorder %v77, 8
  %vm302 = vcmp.ge.s32.totalorder %v78, 8
  %vm303 = vcmp.ge.s32.totalorder %v79, 8
  %vm304 = vcmp.ge.s32.totalorder %v80, 8
  %vm305 = vcmp.ge.s32.totalorder %v81, 8
  %vm306 = vcmp.ge.s32.totalorder %v82, 8
  %vm307 = vcmp.ge.s32.totalorder %v83, 8
  %vm308 = vcmp.ge.s32.totalorder %v84, 8
  %vm309 = vcmp.ge.s32.totalorder %v85, 8
  %vm310 = vcmp.ge.s32.totalorder %v86, 8
  %vm311 = vcmp.ge.s32.totalorder %v87, 8
  %vm312 = vcmp.ge.s32.totalorder %v88, 8
  %vm313 = vcmp.ge.s32.totalorder %v89, 8
  %vm314 = vcmp.ge.s32.totalorder %v90, 8
  %vm315 = vcmp.ge.s32.totalorder %v91, 8
  %vm316 = vcmp.ge.s32.totalorder %v92, 8
  %vm317 = vcmp.ge.s32.totalorder %v93, 8
  %vm318 = vcmp.ge.s32.totalorder %v94, 8
  %vm319 = vcmp.ge.s32.totalorder %v95, 8
  %vm320 = vcmp.ge.s32.totalorder %v96, 8
  %vm321 = vcmp.ge.s32.totalorder %v97, 8
  %vm322 = vcmp.ge.s32.totalorder %v98, 8
  %vm323 = vcmp.ge.s32.totalorder %v99, 8
  %vm324 = vcmp.ge.s32.totalorder %v100, 8
  %vm325 = vcmp.ge.s32.totalorder %v101, 8
  %vm326 = vcmp.ge.s32.totalorder %v102, 8
  %vm327 = vcmp.ge.s32.totalorder %v103, 8
  %vm328 = vcmp.ge.s32.totalorder %v104, 8
  %vm329 = vcmp.ge.s32.totalorder %v105, 8
  %vm330 = vcmp.ge.s32.totalorder %v106, 8
  %v331 = vmul.f32 %v9, %v267
  %v332 = vmul.f32 %v10, %v268
  %v333 = vmul.f32 %v11, %v269
  %v334 = vmul.f32 %v12, %v270
  %v335 = vmul.f32 %v13, %v271
  %v336 = vmul.f32 %v14, %v272
  %v337 = vmul.f32 %v15, %v273
  %v338 = vmul.f32 %v16, %v274
  %v339 = vmul.f32 %v17, %v275
  %v340 = vmul.f32 %v18, %v276
  %v341 = vmul.f32 %v19, %v277
  %v342 = vmul.f32 %v20, %v278
  %v343 = vmul.f32 %v21, %v279
  %v344 = vmul.f32 %v22, %v280
  %v345 = vmul.f32 %v23, %v281
  %v346 = vmul.f32 %v24, %v282
  %v347 = vmul.f32 %v25, %v283
  %v348 = vmul.f32 %v26, %v284
  %v349 = vmul.f32 %v27, %v285
  %v350 = vmul.f32 %v28, %v286
  %v351 = vmul.f32 %v29, %v287
  %v352 = vmul.f32 %v30, %v288
  %v353 = vmul.f32 %v31, %v289
  %v354 = vmul.f32 %v32, %v290
  %v355 = vmul.f32 %v33, %v291
  %v356 = vmul.f32 %v34, %v292
  %v357 = vmul.f32 %v35, %v293
  %v358 = vmul.f32 %v36, %v294
  %v359 = vmul.f32 %v37, %v295
  %v360 = vmul.f32 %v38, %v296
  %v361 = vmul.f32 %v39, %v297
  %v362 = vmul.f32 %v40, %v298
  %v363 = vsel %vm299, %v331, %v9
  %v364 = vsel %vm300, %v332, %v10
  %v365 = vsel %vm301, %v333, %v11
  %v366 = vsel %vm302, %v334, %v12
  %v367 = vsel %vm303, %v335, %v13
  %v368 = vsel %vm304, %v336, %v14
  %v369 = vsel %vm305, %v337, %v15
  %v370 = vsel %vm306, %v338, %v16
  %v371 = vsel %vm307, %v339, %v17
  %v372 = vsel %vm308, %v340, %v18
  %v373 = vsel %vm309, %v341, %v19
  %v374 = vsel %vm310, %v342, %v20
  %v375 = vsel %vm311, %v343, %v21
  %v376 = vsel %vm312, %v344, %v22
  %v377 = vsel %vm313, %v345, %v23
  %v378 = vsel %vm314, %v346, %v24
  %v379 = vsel %vm315, %v347, %v25
  %v380 = vsel %vm316, %v348, %v26
  %v381 = vsel %vm317, %v349, %v27
  %v382 = vsel %vm318, %v350, %v28
  %v383 = vsel %vm319, %v351, %v29
  %v384 = vsel %vm320, %v352, %v30
  %v385 = vsel %vm321, %v353, %v31
  %v386 = vsel %vm322, %v354, %v32
  %v387 = vsel %vm323, %v355, %v33
  %v388 = vsel %vm324, %v356, %v34
  %v389 = vsel %vm325, %v357, %v35
  %v390 = vsel %vm326, %v358, %v36
  %v391 = vsel %vm327, %v359, %v37
  %v392 = vsel %vm328, %v360, %v38
  %v393 = vsel %vm329, %v361, %v39
  %v394 = vsel %vm330, %v362, %v40
  %395 = vst [vmem:[%s1] sm:$0xff] %v363
  %396 = vst [vmem:[%s1 + $0x8] sm:$0xff] %v364
  %397 = vst [vmem:[%s1 + $0x10] sm:$0xff] %v365
  %398 = vst [vmem:[%s1 + $0x18] sm:$0xff] %v366
  %399 = vst [vmem:[%s1 + $0x20] sm:$0xff] %v367
  %400 = vst [vmem:[%s1 + $0x28] sm:$0xff] %v368
  %401 = vst [vmem:[%s1 + $0x30] sm:$0xff] %v369
  %402 = vst [vmem:[%s1 + $0x38] sm:$0xff] %v370
  %403 = vst [vmem:[%s1 + $0x40] sm:$0xff] %v371
  %404 = vst [vmem:[%s1 + $0x48] sm:$0xff] %v372
  %405 = vst [vmem:[%s1 + $0x50] sm:$0xff] %v373
  %406 = vst [vmem:[%s1 + $0x58] sm:$0xff] %v374
  %407 = vst [vmem:[%s1 + $0x60] sm:$0xff] %v375
  %408 = vst [vmem:[%s1 + $0x68] sm:$0xff] %v376
  %409 = vst [vmem:[%s1 + $0x70] sm:$0xff] %v377
  %410 = vst [vmem:[%s1 + $0x78] sm:$0xff] %v378
  %411 = vst [vmem:[%s1 + $0x80] sm:$0xff] %v379
  %412 = vst [vmem:[%s1 + $0x88] sm:$0xff] %v380
  %413 = vst [vmem:[%s1 + $0x90] sm:$0xff] %v381
  %414 = vst [vmem:[%s1 + $0x98] sm:$0xff] %v382
  %415 = vst [vmem:[%s1 + $0xa0] sm:$0xff] %v383
  %416 = vst [vmem:[%s1 + $0xa8] sm:$0xff] %v384
  %417 = vst [vmem:[%s1 + $0xb0] sm:$0xff] %v385
  %418 = vst [vmem:[%s1 + $0xb8] sm:$0xff] %v386
  %419 = vst [vmem:[%s1 + $0xc0] sm:$0xff] %v387
  %420 = vst [vmem:[%s1 + $0xc8] sm:$0xff] %v388
  %421 = vst [vmem:[%s1 + $0xd0] sm:$0xff] %v389
  %422 = vst [vmem:[%s1 + $0xd8] sm:$0xff] %v390
  %423 = vst [vmem:[%s1 + $0xe0] sm:$0xff] %v391
  %424 = vst [vmem:[%s1 + $0xe8] sm:$0xff] %v392
  %425 = vst [vmem:[%s1 + $0xf0] sm:$0xff] %v393
  %426 = vst [vmem:[%s1 + $0xf8] sm:$0xff] %v394
  // Predicated region
  $region6: #{aim_lightgcn_forward.6} parent=0 // pred_check
    _
  $region7: #{aim_lightgcn_forward.6} parent=0 // pred_check_branch
    %428 = sbr.rel (0) target = $region9
  $region8: #{aim_lightgcn_forward.6} parent=0 // pred_region
    _
  $region9: #{aim_lightgcn_forward.6} parent=0 // pred_fallthru
    _
  // Predicated region
  $region10: #{aim_lightgcn_forward.6} parent=0 // pred_check
    _
  $region11: #{aim_lightgcn_forward.6} parent=0 // pred_check_branch
    %430 = sbr.rel (0) target = $region13
  $region12: #{aim_lightgcn_forward.6} parent=0 // pred_region
    _
  $region13: #{aim_lightgcn_forward.6} parent=0 // pred_fallthru
    _

// kernel: aim_lightgcn_forward.7
$region0: #{aim_lightgcn_forward.7}
  #allocation0 [shape = 'u32[]', space=smem, size = 0x4, offset = 0x4, fixed_abs, tag = 'smem constant byte address 0x4 - core index']
  #allocation1 [shape = 'u32[144,128]{1,0:T(1,128)}', space=vmem, size = 0x12000, scoped, tag = 'internal scratch']
  %s0 = inlined_call_operand.vmem [shape: f32[32,16], index: 0, kind: input, shape index: {}]
  %s1 = inlined_call_operand.vmem [shape: f32[32,16], index: 1, kind: input, shape index: {}]
  %s2 = inlined_call_operand.vmem [shape: f32[8,1], index: 2, kind: input, shape index: {}]
  %s3 = inlined_call_operand.vmem [shape: f32[8,1], index: 3, kind: input, shape index: {}]
  %s4 = inlined_call_operand.hbm [shape: f32[8,8], index: 4, kind: output, shape index: {0}]
  %s5 = inlined_call_operand.hbm [shape: f32[8,8], index: 5, kind: output, shape index: {1}]
  %6 = xla_tuple %s4, %s5
  %s7 = sld [smem:[#allocation0]]
  $region34: #{aim_lightgcn_forward.7} parent=0
    _
  %s9 = ssub.s32 1, %s7
  %s10 = scalar_select 0, %s9, %s7
  $region1: #{aim_lightgcn_forward.7} parent=0
    #allocation2 [shape = 'u8[4096]{0}', space=vmem, size = 0x1000, scoped, tag = 'output window, operand 0, single buffered']
    #allocation3 [shape = 's32[1]{0}', space=sflag, size = 0x4, scoped, tag = 'scoped memory for aim_lightgcn_forward.7']
    #allocation4 [shape = 'u8[4096]{0}', space=vmem, size = 0x1000, scoped, tag = 'output window, operand 1, single buffered']
    #allocation5 [shape = 's32[1]{0}', space=sflag, size = 0x4, scoped, tag = 'scoped memory for aim_lightgcn_forward.7']
    %11 = vsyncpa [#allocation3], 0
    %12 = vsyncpa [#allocation5], 0
    // Predicated region
    $region2: #{aim_lightgcn_forward.7} parent=1 // pred_check
      _
    $region3: #{aim_lightgcn_forward.7} parent=1 // pred_check_branch
      %14 = sbr.rel (0) target = $region5
    $region4: #{aim_lightgcn_forward.7} parent=1 // pred_region
      _
    $region5: #{aim_lightgcn_forward.7} parent=1 // pred_fallthru
      _
    // Predicated region
    $region6: #{aim_lightgcn_forward.7} parent=1 // pred_check
      _
    $region7: #{aim_lightgcn_forward.7} parent=1 // pred_check_branch
      %16 = sbr.rel (0) target = $region9
    $region8: #{aim_lightgcn_forward.7} parent=1 // pred_region
      _
    $region9: #{aim_lightgcn_forward.7} parent=1 // pred_fallthru
      _
    // Predicated region
    $region10: #{aim_lightgcn_forward.7} parent=1 // pred_check
      _
    $region11: #{aim_lightgcn_forward.7} parent=1 // pred_check_branch
      %18 = sbr.rel (0) target = $region13
    $region12: #{aim_lightgcn_forward.7} parent=1 // pred_region
      _
    $region13: #{aim_lightgcn_forward.7} parent=1 // pred_fallthru
      _
    // Predicated region
    $region14: #{aim_lightgcn_forward.7} parent=1 // pred_check
      _
    $region15: #{aim_lightgcn_forward.7} parent=1 // pred_check_branch
      %20 = sbr.rel (0) target = $region17
    $region16: #{aim_lightgcn_forward.7} parent=1 // pred_region
      _
    $region17: #{aim_lightgcn_forward.7} parent=1 // pred_fallthru
      _
    %v21 = vld [vmem:[%s0] sm:$0xff]
    %v22 = vld [vmem:[%s0 + $0x8] sm:$0xff]
    %v23 = vld [vmem:[%s0 + $0x10] sm:$0xff]
    %v24 = vld [vmem:[%s0 + $0x18] sm:$0xff]
    %v25 = vld [vmem:[%s1] sm:$0xff]
    %v26 = vld [vmem:[%s1 + $0x8] sm:$0xff]
    %v27 = vld [vmem:[%s1 + $0x10] sm:$0xff]
    %v28 = vld [vmem:[%s1 + $0x18] sm:$0xff]
    %v29 = vmul.f32 %v21, %v25
    %v30 = vmul.f32 %v22, %v26
    %v31 = vmul.f32 %v23, %v27
    %v32 = vmul.f32 %v24, %v28
    %vm33 = vcmask 130048
    %v34 = vsel %vm33, %v29, 0.0
    %v35 = vsel %vm33, %v30, 0.0
    %v36 = vadd.f32 %v34, %v35
    %v37 = vsel %vm33, %v31, 0.0
    %v38 = vadd.f32 %v36, %v37
    %v39 = vsel %vm33, %v32, 0.0
    %v40 = vadd.f32 %v38, %v39
    %v41 = vrot.slane %v40, 4
    %v42 = vadd.f32 %v40, %v41
    %v43 = vrot.slane %v42, 2
    %v44 = vadd.f32 %v42, %v43
    %v45 = vrot.slane %v44, 1
    %v46 = vadd.f32 %v44, %v45
    %v47 = vld [vmem:[%s2] sm:$0xff]
    %49 = vset.pattern.permute.xlu0 0
    %50 = vperm.xlu0 %49, %v47
    %v51 = vpop.permute.xlu0 %50
    %v53 = vadd.f32 %v51, %v46
    %vm54 = vcmask 64512
    %55 = vst.msk [vmem:[#allocation2] sm:$0xff] %vm54, %v53
    %v56 = vld [vmem:[%s3] sm:$0xff]
    %58 = vset.pattern.permute.xlu0 0
    %59 = vperm.xlu0 %58, %v56
    %v60 = vpop.permute.xlu0 %59
    %v62 = vadd.f32 %v60, %v46
    %64 = vrot.lane.b32.xlu0 %v62, 120
    %v65 = vpop.permute.xlu0 %64
    %67 = vst.msk [vmem:[#allocation4] sm:$0xff] %vm54, %v65
    // Predicated region
    $region18: #{aim_lightgcn_forward.7} parent=1 // pred_check
      _
    $region19: #{aim_lightgcn_forward.7} parent=1 // pred_check_branch
      %69 = sbr.rel (0) target = $region21
    $region20: #{aim_lightgcn_forward.7} parent=1 // pred_region
      %s71 = ssub.s32 128, 128
      %72 = vsyncadd [#allocation3], %s71
      %s74 = sshll.u32 [#allocation2], 4
      %s75 = int_to_ptr.vmem [resolvable:$true] %s74
      %77 = dma.vmem_to_hbm [thread:$0]  %s75, 128, %s4, [#allocation3]
    $region21: #{aim_lightgcn_forward.7} parent=1 // pred_fallthru
      _
    // Predicated region
    $region22: #{aim_lightgcn_forward.7} parent=1 // pred_check
      _
    $region23: #{aim_lightgcn_forward.7} parent=1 // pred_check_branch
      %79 = sbr.rel (0) target = $region25
    $region24: #{aim_lightgcn_forward.7} parent=1 // pred_region
      %s81 = ssub.s32 128, 128
      %82 = vsyncadd [#allocation5], %s81
      %s84 = sshll.u32 [#allocation4], 4
      %s85 = int_to_ptr.vmem [resolvable:$true] %s84
      %87 = dma.vmem_to_hbm [thread:$0]  %s85, 128, %s5, [#allocation5]
    $region25: #{aim_lightgcn_forward.7} parent=1 // pred_fallthru
      _
    // Predicated region
    $region26: #{aim_lightgcn_forward.7} parent=1 // pred_check
      _
    $region27: #{aim_lightgcn_forward.7} parent=1 // pred_check_branch
      %89 = sbr.rel (0) target = $region29
    $region28: #{aim_lightgcn_forward.7} parent=1 // pred_region
      %90 = dma.done [#allocation3], 128
    $region29: #{aim_lightgcn_forward.7} parent=1 // pred_fallthru
      _
    // Predicated region
    $region30: #{aim_lightgcn_forward.7} parent=1 // pred_check
      _
    $region31: #{aim_lightgcn_forward.7} parent=1 // pred_check_branch
      %92 = sbr.rel (0) target = $region33
    $region32: #{aim_lightgcn_forward.7} parent=1 // pred_region
      %93 = dma.done [#allocation5], 128
    $region33: #{aim_lightgcn_forward.7} parent=1 // pred_fallthru
      _
    %94 = vsyncpa [#allocation3], 1
    %95 = vsyncpa [#allocation5], 1

// kernel: aim_lightgcn_forward.4
$region0: #{aim_lightgcn_forward.4}
  #allocation0 [shape = 'u32[]', space=smem, size = 0x4, offset = 0x4, fixed_abs, tag = 'smem constant byte address 0x4 - core index']
  #allocation1 [shape = 'u32[144,128]{1,0:T(1,128)}', space=vmem, size = 0x12000, scoped, tag = 'internal scratch']
  #allocation2 [shape = 'f32[256,128]{1,0:T(8,128)}', space=vmem, size = 0x20000, scoped, tag = 'scratch operand']
  #allocation3 [shape = 'f32[1]{0:T(128)S(6)}', space=smem, size = 0x200, scoped, tag = 'scoped memory for aim_lightgcn_forward.4']
  %s0 = inlined_call_operand.vmem [shape: bf16[256,256], index: 0, kind: input, shape index: {}]
  %s1 = inlined_call_operand.vmem [shape: bf16[256,128], index: 1, kind: input, shape index: {}]
  %s2 = inlined_call_operand.vmem [shape: f32[256,128], index: 2, kind: input, shape index: {}, may-alias: {2,5}]
  %s3 = inlined_call_operand.<no memory space> [shape: f32[1], index: 3, kind: input, shape index: {}]
  %s4 = inlined_call_operand.vmem [shape: bf16[256,128], index: 4, kind: output, shape index: {0}]
  %s5 = inlined_call_operand.vmem [shape: f32[256,128], index: 5, kind: output, shape index: {1}, may-alias: {2,5}]
  %6 = xla_tuple %s4, %s5
  %s7 = sld [smem:[#allocation0]]
  $region42: #{aim_lightgcn_forward.4} parent=0
    _
  %s9 = ssub.s32 1, %s7
  %s10 = scalar_select 0, %s9, %s7
  %11 = sst [smem:[#allocation3]] %s3
  // Predicated region
  $region2: #{aim_lightgcn_forward.4} parent=0 // pred_check
    _
  $region3: #{aim_lightgcn_forward.4} parent=0 // pred_check_branch
    %13 = sbr.rel (0) target = $region5
  $region4: #{aim_lightgcn_forward.4} parent=0 // pred_region
    _
  $region5: #{aim_lightgcn_forward.4} parent=0 // pred_fallthru
    _
  // Predicated region
  $region6: #{aim_lightgcn_forward.4} parent=0 // pred_check
    _
  $region7: #{aim_lightgcn_forward.4} parent=0 // pred_check_branch
    %15 = sbr.rel (0) target = $region9
  $region8: #{aim_lightgcn_forward.4} parent=0 // pred_region
    _
  $region9: #{aim_lightgcn_forward.4} parent=0 // pred_fallthru
    _
  // Predicated region
  $region10: #{aim_lightgcn_forward.4} parent=0 // pred_check
    _
  $region11: #{aim_lightgcn_forward.4} parent=0 // pred_check_branch
    %17 = sbr.rel (0) target = $region13
  $region12: #{aim_lightgcn_forward.4} parent=0 // pred_region
    _
  $region13: #{aim_lightgcn_forward.4} parent=0 // pred_fallthru
    _
  // Predicated region
  $region14: #{aim_lightgcn_forward.4} parent=0 // pred_check
    _
  $region15: #{aim_lightgcn_forward.4} parent=0 // pred_check_branch
    %19 = sbr.rel (0) target = $region17
  $region16: #{aim_lightgcn_forward.4} parent=0 // pred_region
    _
  $region17: #{aim_lightgcn_forward.4} parent=0 // pred_fallthru
    _
  %p21 = scmp.eq.s32.totalorder 0, 0
  // Predicated region
  $region18: #{aim_lightgcn_forward.4} parent=0 // pred_check
    %p22 = pneg %p21
  $region19: #{aim_lightgcn_forward.4} parent=0 // pred_check_branch
    %24 = sbr.rel (%p22) target = $region21
  $region20: #{aim_lightgcn_forward.4} parent=0 // pred_region
    %25 = vst [vmem:[#allocation2] sm:$0xff] 0.0
    %26 = vst [vmem:[#allocation2 + $0x8] sm:$0xff] 0.0
    %27 = vst [vmem:[#allocation2 + $0x10] sm:$0xff] 0.0
    %28 = vst [vmem:[#allocation2 + $0x18] sm:$0xff] 0.0
    %29 = vst [vmem:[#allocation2 + $0x20] sm:$0xff] 0.0
    %30 = vst [vmem:[#allocation2 + $0x28] sm:$0xff] 0.0
    %31 = vst [vmem:[#allocation2 + $0x30] sm:$0xff] 0.0
    %32 = vst [vmem:[#allocation2 + $0x38] sm:$0xff] 0.0
    %33 = vst [vmem:[#allocation2 + $0x40] sm:$0xff] 0.0
    %34 = vst [vmem:[#allocation2 + $0x48] sm:$0xff] 0.0
    %35 = vst [vmem:[#allocation2 + $0x50] sm:$0xff] 0.0
    %36 = vst [vmem:[#allocation2 + $0x58] sm:$0xff] 0.0
    %37 = vst [vmem:[#allocation2 + $0x60] sm:$0xff] 0.0
    %38 = vst [vmem:[#allocation2 + $0x68] sm:$0xff] 0.0
    %39 = vst [vmem:[#allocation2 + $0x70] sm:$0xff] 0.0
    %40 = vst [vmem:[#allocation2 + $0x78] sm:$0xff] 0.0
    %41 = vst [vmem:[#allocation2 + $0x80] sm:$0xff] 0.0
    %42 = vst [vmem:[#allocation2 + $0x88] sm:$0xff] 0.0
    %43 = vst [vmem:[#allocation2 + $0x90] sm:$0xff] 0.0
    %44 = vst [vmem:[#allocation2 + $0x98] sm:$0xff] 0.0
    %45 = vst [vmem:[#allocation2 + $0xa0] sm:$0xff] 0.0
    %46 = vst [vmem:[#allocation2 + $0xa8] sm:$0xff] 0.0
    %47 = vst [vmem:[#allocation2 + $0xb0] sm:$0xff] 0.0
    %48 = vst [vmem:[#allocation2 + $0xb8] sm:$0xff] 0.0
    %49 = vst [vmem:[#allocation2 + $0xc0] sm:$0xff] 0.0
    %50 = vst [vmem:[#allocation2 + $0xc8] sm:$0xff] 0.0
    %51 = vst [vmem:[#allocation2 + $0xd0] sm:$0xff] 0.0
    %52 = vst [vmem:[#allocation2 + $0xd8] sm:$0xff] 0.0
    %53 = vst [vmem:[#allocation2 + $0xe0] sm:$0xff] 0.0
    %54 = vst [vmem:[#allocation2 + $0xe8] sm:$0xff] 0.0
    %55 = vst [vmem:[#allocation2 + $0xf0] sm:$0xff] 0.0
    %56 = vst [vmem:[#allocation2 + $0xf8] sm:$0xff] 0.0
  $region21: #{aim_lightgcn_forward.4} parent=0 // pred_fallthru
    _
  %s57 = smul.u32 0, 256
  %s58 = sshra.s32 %s57, 3
  %s59 = sand.u32 %s57, 7
  %s60 = smul.addr %s58, 4
  %s61 = scalar_lea.vmem %s1, %s60
  %v62 = vld [vmem:[%s61] sm:$0xf]
  %v63 = vld [vmem:[%s61 + $0x4] sm:$0xf]
  %v64 = vld [vmem:[%s61 + $0x8] sm:$0xf]
  %v65 = vld [vmem:[%s61 + $0xc] sm:$0xf]
  %v66 = vld [vmem:[%s61 + $0x10] sm:$0xf]
  %v67 = vld [vmem:[%s61 + $0x14] sm:$0xf]
  %v68 = vld [vmem:[%s61 + $0x18] sm:$0xf]
  %v69 = vld [vmem:[%s61 + $0x1c] sm:$0xf]
  %v70 = vld [vmem:[%s61 + $0x20] sm:$0xf]
  %v71 = vld [vmem:[%s61 + $0x24] sm:$0xf]
  %v72 = vld [vmem:[%s61 + $0x28] sm:$0xf]
  %v73 = vld [vmem:[%s61 + $0x2c] sm:$0xf]
  %v74 = vld [vmem:[%s61 + $0x30] sm:$0xf]
  %v75 = vld [vmem:[%s61 + $0x34] sm:$0xf]
  %v76 = vld [vmem:[%s61 + $0x38] sm:$0xf]
  %v77 = vld [vmem:[%s61 + $0x3c] sm:$0xf]
  %v78 = vld [vmem:[%s61 + $0x40] sm:$0xf]
  %v79 = vld [vmem:[%s61 + $0x44] sm:$0xf]
  %v80 = vld [vmem:[%s61 + $0x48] sm:$0xf]
  %v81 = vld [vmem:[%s61 + $0x4c] sm:$0xf]
  %v82 = vld [vmem:[%s61 + $0x50] sm:$0xf]
  %v83 = vld [vmem:[%s61 + $0x54] sm:$0xf]
  %v84 = vld [vmem:[%s61 + $0x58] sm:$0xf]
  %v85 = vld [vmem:[%s61 + $0x5c] sm:$0xf]
  %v86 = vld [vmem:[%s61 + $0x60] sm:$0xf]
  %v87 = vld [vmem:[%s61 + $0x64] sm:$0xf]
  %v88 = vld [vmem:[%s61 + $0x68] sm:$0xf]
  %v89 = vld [vmem:[%s61 + $0x6c] sm:$0xf]
  %v90 = vld [vmem:[%s61 + $0x70] sm:$0xf]
  %v91 = vld [vmem:[%s61 + $0x74] sm:$0xf]
  %v92 = vld [vmem:[%s61 + $0x78] sm:$0xf]
  %v93 = vld [vmem:[%s61 + $0x7c] sm:$0xf]
  %v94 = vld [vmem:[#allocation2] sm:$0xff]
  %v95 = vld [vmem:[#allocation2 + $0x8] sm:$0xff]
  %v96 = vld [vmem:[#allocation2 + $0x10] sm:$0xff]
  %v97 = vld [vmem:[#allocation2 + $0x18] sm:$0xff]
  %v98 = vld [vmem:[#allocation2 + $0x20] sm:$0xff]
  %v99 = vld [vmem:[#allocation2 + $0x28] sm:$0xff]
  %v100 = vld [vmem:[#allocation2 + $0x30] sm:$0xff]
  %v101 = vld [vmem:[#allocation2 + $0x38] sm:$0xff]
  %v102 = vld [vmem:[#allocation2 + $0x40] sm:$0xff]
  %v103 = vld [vmem:[#allocation2 + $0x48] sm:$0xff]
  %v104 = vld [vmem:[#allocation2 + $0x50] sm:$0xff]
  %v105 = vld [vmem:[#allocation2 + $0x58] sm:$0xff]
  %v106 = vld [vmem:[#allocation2 + $0x60] sm:$0xff]
  %v107 = vld [vmem:[#allocation2 + $0x68] sm:$0xff]
  %v108 = vld [vmem:[#allocation2 + $0x70] sm:$0xff]
  %v109 = vld [vmem:[#allocation2 + $0x78] sm:$0xff]
  %v110 = vld [vmem:[#allocation2 + $0x80] sm:$0xff]
  %v111 = vld [vmem:[#allocation2 + $0x88] sm:$0xff]
  %v112 = vld [vmem:[#allocation2 + $0x90] sm:$0xff]
  %v113 = vld [vmem:[#allocation2 + $0x98] sm:$0xff]
  %v114 = vld [vmem:[#allocation2 + $0xa0] sm:$0xff]
  %v115 = vld [vmem:[#allocation2 + $0xa8] sm:$0xff]
  %v116 = vld [vmem:[#allocation2 + $0xb0] sm:$0xff]
  %v117 = vld [vmem:[#allocation2 + $0xb8] sm:$0xff]
  %v118 = vld [vmem:[#allocation2 + $0xc0] sm:$0xff]
  %v119 = vld [vmem:[#allocation2 + $0xc8] sm:$0xff]
  %v120 = vld [vmem:[#allocation2 + $0xd0] sm:$0xff]
  %v121 = vld [vmem:[#allocation2 + $0xd8] sm:$0xff]
  %v122 = vld [vmem:[#allocation2 + $0xe0] sm:$0xff]
  %v123 = vld [vmem:[#allocation2 + $0xe8] sm:$0xff]
  %v124 = vld [vmem:[#allocation2 + $0xf0] sm:$0xff]
  %v125 = vld [vmem:[#allocation2 + $0xf8] sm:$0xff]
  %v126 = vld [vmem:[%s0] sm:$0xff]
  %v127 = vld [vmem:[%s0 + $0x8] sm:$0xff]
  %v128 = vld [vmem:[%s0 + $0x10] sm:$0xff]
  %v129 = vld [vmem:[%s0 + $0x18] sm:$0xff]
  %v130 = vld [vmem:[%s0 + $0x20] sm:$0xff]
  %v131 = vld [vmem:[%s0 + $0x28] sm:$0xff]
  %v132 = vld [vmem:[%s0 + $0x30] sm:$0xff]
  %v133 = vld [vmem:[%s0 + $0x38] sm:$0xff]
  %v134 = vld [vmem:[%s0 + $0x40] sm:$0xff]
  %v135 = vld [vmem:[%s0 + $0x48] sm:$0xff]
  %v136 = vld [vmem:[%s0 + $0x50] sm:$0xff]
  %v137 = vld [vmem:[%s0 + $0x58] sm:$0xff]
  %v138 = vld [vmem:[%s0 + $0x60] sm:$0xff]
  %v139 = vld [vmem:[%s0 + $0x68] sm:$0xff]
  %v140 = vld [vmem:[%s0 + $0x70] sm:$0xff]
  %v141 = vld [vmem:[%s0 + $0x78] sm:$0xff]
  %v142 = vld [vmem:[%s0 + $0x80] sm:$0xff]
  %v143 = vld [vmem:[%s0 + $0x88] sm:$0xff]
  %v144 = vld [vmem:[%s0 + $0x90] sm:$0xff]
  %v145 = vld [vmem:[%s0 + $0x98] sm:$0xff]
  %v146 = vld [vmem:[%s0 + $0xa0] sm:$0xff]
  %v147 = vld [vmem:[%s0 + $0xa8] sm:$0xff]
  %v148 = vld [vmem:[%s0 + $0xb0] sm:$0xff]
  %v149 = vld [vmem:[%s0 + $0xb8] sm:$0xff]
  %v150 = vld [vmem:[%s0 + $0xc0] sm:$0xff]
  %v151 = vld [vmem:[%s0 + $0xc8] sm:$0xff]
  %v152 = vld [vmem:[%s0 + $0xd0] sm:$0xff]
  %v153 = vld [vmem:[%s0 + $0xd8] sm:$0xff]
  %v154 = vld [vmem:[%s0 + $0xe0] sm:$0xff]
  %v155 = vld [vmem:[%s0 + $0xe8] sm:$0xff]
  %v156 = vld [vmem:[%s0 + $0xf0] sm:$0xff]
  %v157 = vld [vmem:[%s0 + $0xf8] sm:$0xff]
  %v190 = vunpack.c.l.b16 %v126
  %v191 = vunpack.c.h.b16 %v126
  %v192 = vunpack.c.l.b16 %v127
  %v193 = vunpack.c.h.b16 %v127
  %v194 = vunpack.c.l.b16 %v128
  %v195 = vunpack.c.h.b16 %v128
  %v196 = vunpack.c.l.b16 %v129
  %v197 = vunpack.c.h.b16 %v129
  %v198 = vunpack.c.l.b16 %v130
  %v199 = vunpack.c.h.b16 %v130
  %v200 = vunpack.c.l.b16 %v131
  %v201 = vunpack.c.h.b16 %v131
  %v202 = vunpack.c.l.b16 %v132
  %v203 = vunpack.c.h.b16 %v132
  %v204 = vunpack.c.l.b16 %v133
  %v205 = vunpack.c.h.b16 %v133
  %v206 = vunpack.c.l.b16 %v134
  %v207 = vunpack.c.h.b16 %v134
  %v208 = vunpack.c.l.b16 %v135
  %v209 = vunpack.c.h.b16 %v135
  %v210 = vunpack.c.l.b16 %v136
  %v211 = vunpack.c.h.b16 %v136
  %v212 = vunpack.c.l.b16 %v137
  %v213 = vunpack.c.h.b16 %v137
  %v214 = vunpack.c.l.b16 %v138
  %v215 = vunpack.c.h.b16 %v138
  %v216 = vunpack.c.l.b16 %v139
  %v217 = vunpack.c.h.b16 %v139
  %v218 = vunpack.c.l.b16 %v140
  %v219 = vunpack.c.h.b16 %v140
  %v220 = vunpack.c.l.b16 %v141
  %v221 = vunpack.c.h.b16 %v141
  %v222 = vunpack.c.l.b16 %v142
  %v223 = vunpack.c.h.b16 %v142
  %v224 = vunpack.c.l.b16 %v143
  %v225 = vunpack.c.h.b16 %v143
  %v226 = vunpack.c.l.b16 %v144
  %v227 = vunpack.c.h.b16 %v144
  %v228 = vunpack.c.l.b16 %v145
  %v229 = vunpack.c.h.b16 %v145
  %v230 = vunpack.c.l.b16 %v146
  %v231 = vunpack.c.h.b16 %v146
  %v232 = vunpack.c.l.b16 %v147
  %v233 = vunpack.c.h.b16 %v147
  %v234 = vunpack.c.l.b16 %v148
  %v235 = vunpack.c.h.b16 %v148
  %v236 = vunpack.c.l.b16 %v149
  %v237 = vunpack.c.h.b16 %v149
  %v238 = vunpack.c.l.b16 %v150
  %v239 = vunpack.c.h.b16 %v150
  %v240 = vunpack.c.l.b16 %v151
  %v241 = vunpack.c.h.b16 %v151
  %v242 = vunpack.c.l.b16 %v152
  %v243 = vunpack.c.h.b16 %v152
  %v244 = vunpack.c.l.b16 %v153
  %v245 = vunpack.c.h.b16 %v153
  %v246 = vunpack.c.l.b16 %v154
  %v247 = vunpack.c.h.b16 %v154
  %v248 = vunpack.c.l.b16 %v155
  %v249 = vunpack.c.h.b16 %v155
  %v250 = vunpack.c.l.b16 %v156
  %v251 = vunpack.c.h.b16 %v156
  %v252 = vunpack.c.l.b16 %v157
  %v253 = vunpack.c.h.b16 %v157
  %v254 = vpack.c.b16 %v192, %v190
  %v255 = vpack.c.b16 %v193, %v191
  %v256 = vpack.c.b16 %v196, %v194
  %v257 = vpack.c.b16 %v197, %v195
  %v258 = vpack.c.b16 %v200, %v198
  %v259 = vpack.c.b16 %v201, %v199
  %v260 = vpack.c.b16 %v204, %v202
  %v261 = vpack.c.b16 %v205, %v203
  %v262 = vpack.c.b16 %v208, %v206
  %v263 = vpack.c.b16 %v209, %v207
  %v264 = vpack.c.b16 %v212, %v210
  %v265 = vpack.c.b16 %v213, %v211
  %v266 = vpack.c.b16 %v216, %v214
  %v267 = vpack.c.b16 %v217, %v215
  %v268 = vpack.c.b16 %v220, %v218
  %v269 = vpack.c.b16 %v221, %v219
  %v270 = vpack.c.b16 %v224, %v222
  %v271 = vpack.c.b16 %v225, %v223
  %v272 = vpack.c.b16 %v228, %v226
  %v273 = vpack.c.b16 %v229, %v227
  %v274 = vpack.c.b16 %v232, %v230
  %v275 = vpack.c.b16 %v233, %v231
  %v276 = vpack.c.b16 %v236, %v234
  %v277 = vpack.c.b16 %v237, %v235
  %v278 = vpack.c.b16 %v240, %v238
  %v279 = vpack.c.b16 %v241, %v239
  %v280 = vpack.c.b16 %v244, %v242
  %v281 = vpack.c.b16 %v245, %v243
  %v282 = vpack.c.b16 %v248, %v246
  %v283 = vpack.c.b16 %v249, %v247
  %v284 = vpack.c.b16 %v252, %v250
  %v285 = vpack.c.b16 %v253, %v251
  %v350 = vunpack.c.l.b16 %v62
  %v351 = vunpack.c.l.b16 %v63
  %v352 = vunpack.c.l.b16 %v64
  %v353 = vunpack.c.l.b16 %v65
  %v354 = vunpack.c.l.b16 %v66
  %v355 = vunpack.c.l.b16 %v67
  %v356 = vunpack.c.l.b16 %v68
  %v357 = vunpack.c.l.b16 %v69
  %v358 = vunpack.c.l.b16 %v70
  %v359 = vunpack.c.l.b16 %v71
  %v360 = vunpack.c.l.b16 %v72
  %v361 = vunpack.c.l.b16 %v73
  %v362 = vunpack.c.l.b16 %v74
  %v363 = vunpack.c.l.b16 %v75
  %v364 = vunpack.c.l.b16 %v76
  %v365 = vunpack.c.l.b16 %v77
  %v366 = vunpack.c.l.b16 %v78
  %v367 = vunpack.c.l.b16 %v79
  %v368 = vunpack.c.l.b16 %v80
  %v369 = vunpack.c.l.b16 %v81
  %v370 = vunpack.c.l.b16 %v82
  %v371 = vunpack.c.l.b16 %v83
  %v372 = vunpack.c.l.b16 %v84
  %v373 = vunpack.c.l.b16 %v85
  %v374 = vunpack.c.l.b16 %v86
  %v375 = vunpack.c.l.b16 %v87
  %v376 = vunpack.c.l.b16 %v88
  %v377 = vunpack.c.l.b16 %v89
  %v378 = vunpack.c.l.b16 %v90
  %v379 = vunpack.c.l.b16 %v91
  %v380 = vunpack.c.l.b16 %v92
  %v381 = vunpack.c.l.b16 %v93
  %v382 = vpack.c.b16 %v351, %v350
  %v383 = vpack.c.b16 %v353, %v352
  %v384 = vpack.c.b16 %v355, %v354
  %v385 = vpack.c.b16 %v357, %v356
  %v386 = vpack.c.b16 %v359, %v358
  %v387 = vpack.c.b16 %v361, %v360
  %v388 = vpack.c.b16 %v363, %v362
  %v389 = vpack.c.b16 %v365, %v364
  %v390 = vpack.c.b16 %v367, %v366
  %v391 = vpack.c.b16 %v369, %v368
  %v392 = vpack.c.b16 %v371, %v370
  %v393 = vpack.c.b16 %v373, %v372
  %v394 = vpack.c.b16 %v375, %v374
  %v395 = vpack.c.b16 %v377, %v376
  %v396 = vpack.c.b16 %v379, %v378
  %v397 = vpack.c.b16 %v381, %v380
  %414 = vmatprep.subr.bf16.mxu0 0
  %415 = vmatpush1.bf16.msra.mxu0 %v382
  %416 = vmatprep.subr.bf16.mxu0 0
  %417 = vmatpush1.bf16.msra.mxu0 %v383
  %418 = vmatprep.subr.bf16.mxu0 0
  %419 = vmatpush1.bf16.msra.mxu0 %v384
  %420 = vmatprep.subr.bf16.mxu0 0
  %421 = vmatpush1.bf16.msra.mxu0 %v385
  %422 = vmatprep.subr.bf16.mxu0 0
  %423 = vmatpush1.bf16.msra.mxu0 %v386
  %424 = vmatprep.subr.bf16.mxu0 0
  %425 = vmatpush1.bf16.msra.mxu0 %v387
  %426 = vmatprep.subr.bf16.mxu0 0
  %427 = vmatpush1.bf16.msra.mxu0 %v388
  %428 = vmatprep.subr.bf16.mxu0 0
  %429 = vmatpush1.bf16.msra.mxu0 %v389
  %430 = vmatprep.subr.bf16.mxu0 0
  %431 = vmatpush1.bf16.msra.mxu0 %v390
  %432 = vmatprep.subr.bf16.mxu0 0
  %433 = vmatpush1.bf16.msra.mxu0 %v391
  %434 = vmatprep.subr.bf16.mxu0 0
  %435 = vmatpush1.bf16.msra.mxu0 %v392
  %436 = vmatprep.subr.bf16.mxu0 0
  %437 = vmatpush1.bf16.msra.mxu0 %v393
  %438 = vmatprep.subr.bf16.mxu0 0
  %439 = vmatpush1.bf16.msra.mxu0 %v394
  %440 = vmatprep.subr.bf16.mxu0 0
  %441 = vmatpush1.bf16.msra.mxu0 %v395
  %442 = vmatprep.subr.bf16.mxu0 0
  %443 = vmatpush1.bf16.msra.mxu0 %v396
  %444 = vmatprep.subr.bf16.mxu0 0
  %445 = vmatpush1.bf16.msra.mxu0 %v397
  %446 = vmatprep.mubr.bf16.mxu0 %v255
  %447 = vmatmul.mubr.bf16.gmra.mrb[0].mxu0 %v254
  %v448 = vpop.f32.mrb[0].mxu0
  %v449 = vadd.f32 0.0, %v448
  %v450 = vpop.f32.mrb[0].mxu0
  %v451 = vpop.f32.mrb[0].mxu0
  %v452 = vadd.f32 0.0, %v451
  %v453 = vpop.f32.mrb[0].mxu0
  %454 = vmatprep.mubr.bf16.mxu0 %v257
  %455 = vmatmul.mubr.bf16.gmra.mrb[0].mxu0 %v256
  %v456 = vpop.f32.mrb[0].mxu0
  %v457 = vadd.f32 0.0, %v456
  %v458 = vpop.f32.mrb[0].mxu0
  %v459 = vpop.f32.mrb[0].mxu0
  %v460 = vadd.f32 0.0, %v459
  %v461 = vpop.f32.mrb[0].mxu0
  %462 = vmatprep.mubr.bf16.mxu0 %v259
  %463 = vmatmul.mubr.bf16.gmra.mrb[0].mxu0 %v258
  %v464 = vpop.f32.mrb[0].mxu0
  %v465 = vadd.f32 0.0, %v464
  %v466 = vpop.f32.mrb[0].mxu0
  %v467 = vpop.f32.mrb[0].mxu0
  %v468 = vadd.f32 0.0, %v467
  %v469 = vpop.f32.mrb[0].mxu0
  %470 = vmatprep.mubr.bf16.mxu0 %v261
  %471 = vmatmul.mubr.bf16.gmra.mrb[0].mxu0 %v260
  %v472 = vpop.f32.mrb[0].mxu0
  %v473 = vadd.f32 0.0, %v472
  %v474 = vpop.f32.mrb[0].mxu0
  %v475 = vpop.f32.mrb[0].mxu0
  %v476 = vadd.f32 0.0, %v475
  %v477 = vpop.f32.mrb[0].mxu0
  %478 = vmatprep.mubr.bf16.mxu0 %v263
  %479 = vmatmul.mubr.bf16.gmra.mrb[0].mxu0 %v262
  %v480 = vpop.f32.mrb[0].mxu0
  %v481 = vadd.f32 0.0, %v480
  %v482 = vpop.f32.mrb[0].mxu0
  %v483 = vpop.f32.mrb[0].mxu0
  %v484 = vadd.f32 0.0, %v483
  %v485 = vpop.f32.mrb[0].mxu0
  %486 = vmatprep.mubr.bf16.mxu0 %v265
  %487 = vmatmul.mubr.bf16.gmra.mrb[0].mxu0 %v264
  %v488 = vpop.f32.mrb[0].mxu0
  %v489 = vadd.f32 0.0, %v488
  %v490 = vpop.f32.mrb[0].mxu0
  %v491 = vpop.f32.mrb[0].mxu0
  %v492 = vadd.f32 0.0, %v491
  %v493 = vpop.f32.mrb[0].mxu0
  %494 = vmatprep.mubr.bf16.mxu0 %v267
  %495 = vmatmul.mubr.bf16.gmra.mrb[0].mxu0 %v266
  %v496 = vpop.f32.mrb[0].mxu0
  %v497 = vadd.f32 0.0, %v496
  %v498 = vpop.f32.mrb[0].mxu0
  %v499 = vpop.f32.mrb[0].mxu0
  %v500 = vadd.f32 0.0, %v499
  %v501 = vpop.f32.mrb[0].mxu0
  %502 = vmatprep.mubr.bf16.mxu0 %v269
  %503 = vmatmul.mubr.bf16.gmra.mrb[0].mxu0 %v268
  %v504 = vpop.f32.mrb[0].mxu0
  %v505 = vadd.f32 0.0, %v504
  %v506 = vpop.f32.mrb[0].mxu0
  %v507 = vpop.f32.mrb[0].mxu0
  %v508 = vadd.f32 0.0, %v507
  %v509 = vpop.f32.mrb[0].mxu0
  %510 = vmatprep.mubr.bf16.mxu0 %v271
  %511 = vmatmul.mubr.bf16.gmra.mrb[0].mxu0 %v270
  %v512 = vpop.f32.mrb[0].mxu0
  %v513 = vadd.f32 0.0, %v512
  %v514 = vpop.f32.mrb[0].mxu0
  %v515 = vpop.f32.mrb[0].mxu0
  %v516 = vadd.f32 0.0, %v515
  %v517 = vpop.f32.mrb[0].mxu0
  %518 = vmatprep.mubr.bf16.mxu0 %v273
  %519 = vmatmul.mubr.bf16.gmra.mrb[0].mxu0 %v272
  %v520 = vpop.f32.mrb[0].mxu0
  %v521 = vadd.f32 0.0, %v520
  %v522 = vpop.f32.mrb[0].mxu0
  %v523 = vpop.f32.mrb[0].mxu0
  %v524 = vadd.f32 0.0, %v523
  %v525 = vpop.f32.mrb[0].mxu0
  %526 = vmatprep.mubr.bf16.mxu0 %v275
  %527 = vmatmul.mubr.bf16.gmra.mrb[0].mxu0 %v274
  %v528 = vpop.f32.mrb[0].mxu0
  %v529 = vadd.f32 0.0, %v528
  %v530 = vpop.f32.mrb[0].mxu0
  %v531 = vpop.f32.mrb[0].mxu0
  %v532 = vadd.f32 0.0, %v531
  %v533 = vpop.f32.mrb[0].mxu0
  %534 = vmatprep.mubr.bf16.mxu0 %v277
  %535 = vmatmul.mubr.bf16.gmra.mrb[0].mxu0 %v276
  %v536 = vpop.f32.mrb[0].mxu0
  %v537 = vadd.f32 0.0, %v536
  %v538 = vpop.f32.mrb[0].mxu0
  %v539 = vpop.f32.mrb[0].mxu0
  %v540 = vadd.f32 0.0, %v539
  %v541 = vpop.f32.mrb[0].mxu0
  %542 = vmatprep.mubr.bf16.mxu0 %v279
  %543 = vmatmul.mubr.bf16.gmra.mrb[0].mxu0 %v278
  %v544 = vpop.f32.mrb[0].mxu0
  %v545 = vadd.f32 0.0, %v544
  %v546 = vpop.f32.mrb[0].mxu0
  %v547 = vpop.f32.mrb[0].mxu0
  %v548 = vadd.f32 0.0, %v547
  %v549 = vpop.f32.mrb[0].mxu0
  %550 = vmatprep.mubr.bf16.mxu0 %v281
  %551 = vmatmul.mubr.bf16.gmra.mrb[0].mxu0 %v280
  %v552 = vpop.f32.mrb[0].mxu0
  %v553 = vadd.f32 0.0, %v552
  %v554 = vpop.f32.mrb[0].mxu0
  %v555 = vpop.f32.mrb[0].mxu0
  %v556 = vadd.f32 0.0, %v555
  %v557 = vpop.f32.mrb[0].mxu0
  %558 = vmatprep.mubr.bf16.mxu0 %v283
  %559 = vmatmul.mubr.bf16.gmra.mrb[0].mxu0 %v282
  %v560 = vpop.f32.mrb[0].mxu0
  %v561 = vadd.f32 0.0, %v560
  %v562 = vpop.f32.mrb[0].mxu0
  %v563 = vpop.f32.mrb[0].mxu0
  %v564 = vadd.f32 0.0, %v563
  %v565 = vpop.f32.mrb[0].mxu0
  %566 = vmatprep.mubr.bf16.mxu0 %v285
  %567 = vmatmul.mubr.bf16.gmra.mrb[0].mxu0 %v284
  %v568 = vpop.f32.mrb[0].mxu0
  %v569 = vadd.f32 0.0, %v568
  %v570 = vpop.f32.mrb[0].mxu0
  %v571 = vpop.f32.mrb[0].mxu0
  %v572 = vadd.f32 0.0, %v571
  %v573 = vpop.f32.mrb[0].mxu0
  %574 = vdwg.mxu0
  %v575 = vadd.f32 %v94, %v449
  %v576 = vadd.f32 %v95, %v452
  %v577 = vadd.f32 %v96, %v457
  %v578 = vadd.f32 %v97, %v460
  %v579 = vadd.f32 %v98, %v465
  %v580 = vadd.f32 %v99, %v468
  %v581 = vadd.f32 %v100, %v473
  %v582 = vadd.f32 %v101, %v476
  %v583 = vadd.f32 %v102, %v481
  %v584 = vadd.f32 %v103, %v484
  %v585 = vadd.f32 %v104, %v489
  %v586 = vadd.f32 %v105, %v492
  %v587 = vadd.f32 %v106, %v497
  %v588 = vadd.f32 %v107, %v500
  %v589 = vadd.f32 %v108, %v505
  %v590 = vadd.f32 %v109, %v508
  %v591 = vadd.f32 %v110, %v513
  %v592 = vadd.f32 %v111, %v516
  %v593 = vadd.f32 %v112, %v521
  %v594 = vadd.f32 %v113, %v524
  %v595 = vadd.f32 %v114, %v529
  %v596 = vadd.f32 %v115, %v532
  %v597 = vadd.f32 %v116, %v537
  %v598 = vadd.f32 %v117, %v540
  %v599 = vadd.f32 %v118, %v545
  %v600 = vadd.f32 %v119, %v548
  %v601 = vadd.f32 %v120, %v553
  %v602 = vadd.f32 %v121, %v556
  %v603 = vadd.f32 %v122, %v561
  %v604 = vadd.f32 %v123, %v564
  %v605 = vadd.f32 %v124, %v569
  %v606 = vadd.f32 %v125, %v572
  %607 = vst [vmem:[#allocation2] sm:$0xff] %v575
  %608 = vst [vmem:[#allocation2 + $0x8] sm:$0xff] %v576
  %609 = vst [vmem:[#allocation2 + $0x10] sm:$0xff] %v577
  %610 = vst [vmem:[#allocation2 + $0x18] sm:$0xff] %v578
  %611 = vst [vmem:[#allocation2 + $0x20] sm:$0xff] %v579
  %612 = vst [vmem:[#allocation2 + $0x28] sm:$0xff] %v580
  %613 = vst [vmem:[#allocation2 + $0x30] sm:$0xff] %v581
  %614 = vst [vmem:[#allocation2 + $0x38] sm:$0xff] %v582
  %615 = vst [vmem:[#allocation2 + $0x40] sm:$0xff] %v583
  %616 = vst [vmem:[#allocation2 + $0x48] sm:$0xff] %v584
  %617 = vst [vmem:[#allocation2 + $0x50] sm:$0xff] %v585
  %618 = vst [vmem:[#allocation2 + $0x58] sm:$0xff] %v586
  %619 = vst [vmem:[#allocation2 + $0x60] sm:$0xff] %v587
  %620 = vst [vmem:[#allocation2 + $0x68] sm:$0xff] %v588
  %621 = vst [vmem:[#allocation2 + $0x70] sm:$0xff] %v589
  %622 = vst [vmem:[#allocation2 + $0x78] sm:$0xff] %v590
  %623 = vst [vmem:[#allocation2 + $0x80] sm:$0xff] %v591
  %624 = vst [vmem:[#allocation2 + $0x88] sm:$0xff] %v592
  %625 = vst [vmem:[#allocation2 + $0x90] sm:$0xff] %v593
  %626 = vst [vmem:[#allocation2 + $0x98] sm:$0xff] %v594
  %627 = vst [vmem:[#allocation2 + $0xa0] sm:$0xff] %v595
  %628 = vst [vmem:[#allocation2 + $0xa8] sm:$0xff] %v596
  %629 = vst [vmem:[#allocation2 + $0xb0] sm:$0xff] %v597
  %630 = vst [vmem:[#allocation2 + $0xb8] sm:$0xff] %v598
  %631 = vst [vmem:[#allocation2 + $0xc0] sm:$0xff] %v599
  %632 = vst [vmem:[#allocation2 + $0xc8] sm:$0xff] %v600
  %633 = vst [vmem:[#allocation2 + $0xd0] sm:$0xff] %v601
  %634 = vst [vmem:[#allocation2 + $0xd8] sm:$0xff] %v602
  %635 = vst [vmem:[#allocation2 + $0xe0] sm:$0xff] %v603
  %636 = vst [vmem:[#allocation2 + $0xe8] sm:$0xff] %v604
  %637 = vst [vmem:[#allocation2 + $0xf0] sm:$0xff] %v605
  %638 = vst [vmem:[#allocation2 + $0xf8] sm:$0xff] %v606
  // Predicated region
  $region22: #{aim_lightgcn_forward.4} parent=0 // pred_check
    %p639 = pneg %p21
  $region23: #{aim_lightgcn_forward.4} parent=0 // pred_check_branch
    %641 = sbr.rel (%p639) target = $region25
  $region24: #{aim_lightgcn_forward.4} parent=0 // pred_region
    %v642 = vld [vmem:[#allocation2] sm:$0xff]
    %v643 = vld [vmem:[#allocation2 + $0x8] sm:$0xff]
    %v644 = vld [vmem:[#allocation2 + $0x10] sm:$0xff]
    %v645 = vld [vmem:[#allocation2 + $0x18] sm:$0xff]
    %v646 = vld [vmem:[#allocation2 + $0x20] sm:$0xff]
    %v647 = vld [vmem:[#allocation2 + $0x28] sm:$0xff]
    %v648 = vld [vmem:[#allocation2 + $0x30] sm:$0xff]
    %v649 = vld [vmem:[#allocation2 + $0x38] sm:$0xff]
    %v650 = vld [vmem:[#allocation2 + $0x40] sm:$0xff]
    %v651 = vld [vmem:[#allocation2 + $0x48] sm:$0xff]
    %v652 = vld [vmem:[#allocation2 + $0x50] sm:$0xff]
    %v653 = vld [vmem:[#allocation2 + $0x58] sm:$0xff]
    %v654 = vld [vmem:[#allocation2 + $0x60] sm:$0xff]
    %v655 = vld [vmem:[#allocation2 + $0x68] sm:$0xff]
    %v656 = vld [vmem:[#allocation2 + $0x70] sm:$0xff]
    %v657 = vld [vmem:[#allocation2 + $0x78] sm:$0xff]
    %v658 = vld [vmem:[#allocation2 + $0x80] sm:$0xff]
    %v659 = vld [vmem:[#allocation2 + $0x88] sm:$0xff]
    %v660 = vld [vmem:[#allocation2 + $0x90] sm:$0xff]
    %v661 = vld [vmem:[#allocation2 + $0x98] sm:$0xff]
    %v662 = vld [vmem:[#allocation2 + $0xa0] sm:$0xff]
    %v663 = vld [vmem:[#allocation2 + $0xa8] sm:$0xff]
    %v664 = vld [vmem:[#allocation2 + $0xb0] sm:$0xff]
    %v665 = vld [vmem:[#allocation2 + $0xb8] sm:$0xff]
    %v666 = vld [vmem:[#allocation2 + $0xc0] sm:$0xff]
    %v667 = vld [vmem:[#allocation2 + $0xc8] sm:$0xff]
    %v668 = vld [vmem:[#allocation2 + $0xd0] sm:$0xff]
    %v669 = vld [vmem:[#allocation2 + $0xd8] sm:$0xff]
    %v670 = vld [vmem:[#allocation2 + $0xe0] sm:$0xff]
    %v671 = vld [vmem:[#allocation2 + $0xe8] sm:$0xff]
    %v672 = vld [vmem:[#allocation2 + $0xf0] sm:$0xff]
    %v673 = vld [vmem:[#allocation2 + $0xf8] sm:$0xff]
    %v674 = vpack.c.bf16 %v643, %v642
    %v675 = vpack.c.bf16 %v645, %v644
    %v676 = vpack.c.bf16 %v647, %v646
    %v677 = vpack.c.bf16 %v649, %v648
    %v678 = vpack.c.bf16 %v651, %v650
    %v679 = vpack.c.bf16 %v653, %v652
    %v680 = vpack.c.bf16 %v655, %v654
    %v681 = vpack.c.bf16 %v657, %v656
    %v682 = vpack.c.bf16 %v659, %v658
    %v683 = vpack.c.bf16 %v661, %v660
    %v684 = vpack.c.bf16 %v663, %v662
    %v685 = vpack.c.bf16 %v665, %v664
    %v686 = vpack.c.bf16 %v667, %v666
    %v687 = vpack.c.bf16 %v669, %v668
    %v688 = vpack.c.bf16 %v671, %v670
    %v689 = vpack.c.bf16 %v673, %v672
    %v706 = vunpack.c.l.b16 %v674
    %v707 = vunpack.c.h.b16 %v674
    %v708 = vunpack.c.l.b16 %v675
    %v709 = vunpack.c.h.b16 %v675
    %v710 = vunpack.c.l.b16 %v676
    %v711 = vunpack.c.h.b16 %v676
    %v712 = vunpack.c.l.b16 %v677
    %v713 = vunpack.c.h.b16 %v677
    %v714 = vunpack.c.l.b16 %v678
    %v715 = vunpack.c.h.b16 %v678
    %v716 = vunpack.c.l.b16 %v679
    %v717 = vunpack.c.h.b16 %v679
    %v718 = vunpack.c.l.b16 %v680
    %v719 = vunpack.c.h.b16 %v680
    %v720 = vunpack.c.l.b16 %v681
    %v721 = vunpack.c.h.b16 %v681
    %v722 = vunpack.c.l.b16 %v682
    %v723 = vunpack.c.h.b16 %v682
    %v724 = vunpack.c.l.b16 %v683
    %v725 = vunpack.c.h.b16 %v683
    %v726 = vunpack.c.l.b16 %v684
    %v727 = vunpack.c.h.b16 %v684
    %v728 = vunpack.c.l.b16 %v685
    %v729 = vunpack.c.h.b16 %v685
    %v730 = vunpack.c.l.b16 %v686
    %v731 = vunpack.c.h.b16 %v686
    %v732 = vunpack.c.l.b16 %v687
    %v733 = vunpack.c.h.b16 %v687
    %v734 = vunpack.c.l.b16 %v688
    %v735 = vunpack.c.h.b16 %v688
    %v736 = vunpack.c.l.b16 %v689
    %v737 = vunpack.c.h.b16 %v689
    %v738 = vpack.c.b16 %v706, %v706
    %v739 = vpack.c.b16 %v707, %v707
    %v740 = vpack.c.b16 %v708, %v708
    %v741 = vpack.c.b16 %v709, %v709
    %v742 = vpack.c.b16 %v710, %v710
    %v743 = vpack.c.b16 %v711, %v711
    %v744 = vpack.c.b16 %v712, %v712
    %v745 = vpack.c.b16 %v713, %v713
    %v746 = vpack.c.b16 %v714, %v714
    %v747 = vpack.c.b16 %v715, %v715
    %v748 = vpack.c.b16 %v716, %v716
    %v749 = vpack.c.b16 %v717, %v717
    %v750 = vpack.c.b16 %v718, %v718
    %v751 = vpack.c.b16 %v719, %v719
    %v752 = vpack.c.b16 %v720, %v720
    %v753 = vpack.c.b16 %v721, %v721
    %v754 = vpack.c.b16 %v722, %v722
    %v755 = vpack.c.b16 %v723, %v723
    %v756 = vpack.c.b16 %v724, %v724
    %v757 = vpack.c.b16 %v725, %v725
    %v758 = vpack.c.b16 %v726, %v726
    %v759 = vpack.c.b16 %v727, %v727
    %v760 = vpack.c.b16 %v728, %v728
    %v761 = vpack.c.b16 %v729, %v729
    %v762 = vpack.c.b16 %v730, %v730
    %v763 = vpack.c.b16 %v731, %v731
    %v764 = vpack.c.b16 %v732, %v732
    %v765 = vpack.c.b16 %v733, %v733
    %v766 = vpack.c.b16 %v734, %v734
    %v767 = vpack.c.b16 %v735, %v735
    %v768 = vpack.c.b16 %v736, %v736
    %v769 = vpack.c.b16 %v737, %v737
    %802 = vst [vmem:[%s4] sm:$0xf] %v738
    %803 = vst [vmem:[%s4 + $0x4] sm:$0xf] %v739
    %804 = vst [vmem:[%s4 + $0x8] sm:$0xf] %v740
    %805 = vst [vmem:[%s4 + $0xc] sm:$0xf] %v741
    %806 = vst [vmem:[%s4 + $0x10] sm:$0xf] %v742
    %807 = vst [vmem:[%s4 + $0x14] sm:$0xf] %v743
    %808 = vst [vmem:[%s4 + $0x18] sm:$0xf] %v744
    %809 = vst [vmem:[%s4 + $0x1c] sm:$0xf] %v745
    %810 = vst [vmem:[%s4 + $0x20] sm:$0xf] %v746
    %811 = vst [vmem:[%s4 + $0x24] sm:$0xf] %v747
    %812 = vst [vmem:[%s4 + $0x28] sm:$0xf] %v748
    %813 = vst [vmem:[%s4 + $0x2c] sm:$0xf] %v749
    %814 = vst [vmem:[%s4 + $0x30] sm:$0xf] %v750
    %815 = vst [vmem:[%s4 + $0x34] sm:$0xf] %v751
    %816 = vst [vmem:[%s4 + $0x38] sm:$0xf] %v752
    %817 = vst [vmem:[%s4 + $0x3c] sm:$0xf] %v753
    %818 = vst [vmem:[%s4 + $0x40] sm:$0xf] %v754
    %819 = vst [vmem:[%s4 + $0x44] sm:$0xf] %v755
    %820 = vst [vmem:[%s4 + $0x48] sm:$0xf] %v756
    %821 = vst [vmem:[%s4 + $0x4c] sm:$0xf] %v757
    %822 = vst [vmem:[%s4 + $0x50] sm:$0xf] %v758
    %823 = vst [vmem:[%s4 + $0x54] sm:$0xf] %v759
    %824 = vst [vmem:[%s4 + $0x58] sm:$0xf] %v760
    %825 = vst [vmem:[%s4 + $0x5c] sm:$0xf] %v761
    %826 = vst [vmem:[%s4 + $0x60] sm:$0xf] %v762
    %827 = vst [vmem:[%s4 + $0x64] sm:$0xf] %v763
    %828 = vst [vmem:[%s4 + $0x68] sm:$0xf] %v764
    %829 = vst [vmem:[%s4 + $0x6c] sm:$0xf] %v765
    %830 = vst [vmem:[%s4 + $0x70] sm:$0xf] %v766
    %831 = vst [vmem:[%s4 + $0x74] sm:$0xf] %v767
    %832 = vst [vmem:[%s4 + $0x78] sm:$0xf] %v768
    %833 = vst [vmem:[%s4 + $0x7c] sm:$0xf] %v769
    %v834 = vld [vmem:[%s2] sm:$0xff]
    %v835 = vld [vmem:[%s2 + $0x8] sm:$0xff]
    %v836 = vld [vmem:[%s2 + $0x10] sm:$0xff]
    %v837 = vld [vmem:[%s2 + $0x18] sm:$0xff]
    %v838 = vld [vmem:[%s2 + $0x20] sm:$0xff]
    %v839 = vld [vmem:[%s2 + $0x28] sm:$0xff]
    %v840 = vld [vmem:[%s2 + $0x30] sm:$0xff]
    %v841 = vld [vmem:[%s2 + $0x38] sm:$0xff]
    %v842 = vld [vmem:[%s2 + $0x40] sm:$0xff]
    %v843 = vld [vmem:[%s2 + $0x48] sm:$0xff]
    %v844 = vld [vmem:[%s2 + $0x50] sm:$0xff]
    %v845 = vld [vmem:[%s2 + $0x58] sm:$0xff]
    %v846 = vld [vmem:[%s2 + $0x60] sm:$0xff]
    %v847 = vld [vmem:[%s2 + $0x68] sm:$0xff]
    %v848 = vld [vmem:[%s2 + $0x70] sm:$0xff]
    %v849 = vld [vmem:[%s2 + $0x78] sm:$0xff]
    %v850 = vld [vmem:[%s2 + $0x80] sm:$0xff]
    %v851 = vld [vmem:[%s2 + $0x88] sm:$0xff]
    %v852 = vld [vmem:[%s2 + $0x90] sm:$0xff]
    %v853 = vld [vmem:[%s2 + $0x98] sm:$0xff]
    %v854 = vld [vmem:[%s2 + $0xa0] sm:$0xff]
    %v855 = vld [vmem:[%s2 + $0xa8] sm:$0xff]
    %v856 = vld [vmem:[%s2 + $0xb0] sm:$0xff]
    %v857 = vld [vmem:[%s2 + $0xb8] sm:$0xff]
    %v858 = vld [vmem:[%s2 + $0xc0] sm:$0xff]
    %v859 = vld [vmem:[%s2 + $0xc8] sm:$0xff]
    %v860 = vld [vmem:[%s2 + $0xd0] sm:$0xff]
    %v861 = vld [vmem:[%s2 + $0xd8] sm:$0xff]
    %v862 = vld [vmem:[%s2 + $0xe0] sm:$0xff]
    %v863 = vld [vmem:[%s2 + $0xe8] sm:$0xff]
    %v864 = vld [vmem:[%s2 + $0xf0] sm:$0xff]
    %v865 = vld [vmem:[%s2 + $0xf8] sm:$0xff]
    %s866 = sld [smem:[#allocation3]]
    %v867 = vstv %s866
    %v868 = vmul.f32 %v867, %v642
    %v869 = vmul.f32 %v867, %v643
    %v870 = vmul.f32 %v867, %v644
    %v871 = vmul.f32 %v867, %v645
    %v872 = vmul.f32 %v867, %v646
    %v873 = vmul.f32 %v867, %v647
    %v874 = vmul.f32 %v867, %v648
    %v875 = vmul.f32 %v867, %v649
    %v876 = vmul.f32 %v867, %v650
    %v877 = vmul.f32 %v867, %v651
    %v878 = vmul.f32 %v867, %v652
    %v879 = vmul.f32 %v867, %v653
    %v880 = vmul.f32 %v867, %v654
    %v881 = vmul.f32 %v867, %v655
    %v882 = vmul.f32 %v867, %v656
    %v883 = vmul.f32 %v867, %v657
    %v884 = vmul.f32 %v867, %v658
    %v885 = vmul.f32 %v867, %v659
    %v886 = vmul.f32 %v867, %v660
    %v887 = vmul.f32 %v867, %v661
    %v888 = vmul.f32 %v867, %v662
    %v889 = vmul.f32 %v867, %v663
    %v890 = vmul.f32 %v867, %v664
    %v891 = vmul.f32 %v867, %v665
    %v892 = vmul.f32 %v867, %v666
    %v893 = vmul.f32 %v867, %v667
    %v894 = vmul.f32 %v867, %v668
    %v895 = vmul.f32 %v867, %v669
    %v896 = vmul.f32 %v867, %v670
    %v897 = vmul.f32 %v867, %v671
    %v898 = vmul.f32 %v867, %v672
    %v899 = vmul.f32 %v867, %v673
    %v900 = vadd.f32 %v834, %v868
    %v901 = vadd.f32 %v835, %v869
    %v902 = vadd.f32 %v836, %v870
    %v903 = vadd.f32 %v837, %v871
    %v904 = vadd.f32 %v838, %v872
    %v905 = vadd.f32 %v839, %v873
    %v906 = vadd.f32 %v840, %v874
    %v907 = vadd.f32 %v841, %v875
    %v908 = vadd.f32 %v842, %v876
    %v909 = vadd.f32 %v843, %v877
    %v910 = vadd.f32 %v844, %v878
    %v911 = vadd.f32 %v845, %v879
    %v912 = vadd.f32 %v846, %v880
    %v913 = vadd.f32 %v847, %v881
    %v914 = vadd.f32 %v848, %v882
    %v915 = vadd.f32 %v849, %v883
    %v916 = vadd.f32 %v850, %v884
    %v917 = vadd.f32 %v851, %v885
    %v918 = vadd.f32 %v852, %v886
    %v919 = vadd.f32 %v853, %v887
    %v920 = vadd.f32 %v854, %v888
    %v921 = vadd.f32 %v855, %v889
    %v922 = vadd.f32 %v856, %v890
    %v923 = vadd.f32 %v857, %v891
    %v924 = vadd.f32 %v858, %v892
    %v925 = vadd.f32 %v859, %v893
    %v926 = vadd.f32 %v860, %v894
    %v927 = vadd.f32 %v861, %v895
    %v928 = vadd.f32 %v862, %v896
    %v929 = vadd.f32 %v863, %v897
    %v930 = vadd.f32 %v864, %v898
    %v931 = vadd.f32 %v865, %v899
    %932 = vst [vmem:[%s5] sm:$0xff] %v900
    %933 = vst [vmem:[%s5 + $0x8] sm:$0xff] %v901
    %934 = vst [vmem:[%s5 + $0x10] sm:$0xff] %v902
    %935 = vst [vmem:[%s5 + $0x18] sm:$0xff] %v903
    %936 = vst [vmem:[%s5 + $0x20] sm:$0xff] %v904
    %937 = vst [vmem:[%s5 + $0x28] sm:$0xff] %v905
    %938 = vst [vmem:[%s5 + $0x30] sm:$0xff] %v906
    %939 = vst [vmem:[%s5 + $0x38] sm:$0xff] %v907
    %940 = vst [vmem:[%s5 + $0x40] sm:$0xff] %v908
    %941 = vst [vmem:[%s5 + $0x48] sm:$0xff] %v909
    %942 = vst [vmem:[%s5 + $0x50] sm:$0xff] %v910
    %943 = vst [vmem:[%s5 + $0x58] sm:$0xff] %v911
    %944 = vst [vmem:[%s5 + $0x60] sm:$0xff] %v912
    %945 = vst [vmem:[%s5 + $0x68] sm:$0xff] %v913
    %946 = vst [vmem:[%s5 + $0x70] sm:$0xff] %v914
    %947 = vst [vmem:[%s5 + $0x78] sm:$0xff] %v915
    %948 = vst [vmem:[%s5 + $0x80] sm:$0xff] %v916
    %949 = vst [vmem:[%s5 + $0x88] sm:$0xff] %v917
    %950 = vst [vmem:[%s5 + $0x90] sm:$0xff] %v918
    %951 = vst [vmem:[%s5 + $0x98] sm:$0xff] %v919
    %952 = vst [vmem:[%s5 + $0xa0] sm:$0xff] %v920
    %953 = vst [vmem:[%s5 + $0xa8] sm:$0xff] %v921
    %954 = vst [vmem:[%s5 + $0xb0] sm:$0xff] %v922
    %955 = vst [vmem:[%s5 + $0xb8] sm:$0xff] %v923
    %956 = vst [vmem:[%s5 + $0xc0] sm:$0xff] %v924
    %957 = vst [vmem:[%s5 + $0xc8] sm:$0xff] %v925
    %958 = vst [vmem:[%s5 + $0xd0] sm:$0xff] %v926
    %959 = vst [vmem:[%s5 + $0xd8] sm:$0xff] %v927
    %960 = vst [vmem:[%s5 + $0xe0] sm:$0xff] %v928
    %961 = vst [vmem:[%s5 + $0xe8] sm:$0xff] %v929
    %962 = vst [vmem:[%s5 + $0xf0] sm:$0xff] %v930
    %963 = vst [vmem:[%s5 + $0xf8] sm:$0xff] %v931
  $region25: #{aim_lightgcn_forward.4} parent=0 // pred_fallthru
    _
  // Predicated region
  $region26: #{aim_lightgcn_forward.4} parent=0 // pred_check
    _
  $region27: #{aim_lightgcn_forward.4} parent=0 // pred_check_branch
    %965 = sbr.rel (0) target = $region29
  $region28: #{aim_lightgcn_forward.4} parent=0 // pred_region
    _
  $region29: #{aim_lightgcn_forward.4} parent=0 // pred_fallthru
    _
  // Predicated region
  $region30: #{aim_lightgcn_forward.4} parent=0 // pred_check
    _
  $region31: #{aim_lightgcn_forward.4} parent=0 // pred_check_branch
    %967 = sbr.rel (0) target = $region33
  $region32: #{aim_lightgcn_forward.4} parent=0 // pred_region
    _
  $region33: #{aim_lightgcn_forward.4} parent=0 // pred_fallthru
    _
  // Predicated region
  $region34: #{aim_lightgcn_forward.4} parent=0 // pred_check
    _
  $region35: #{aim_lightgcn_forward.4} parent=0 // pred_check_branch
    %969 = sbr.rel (0) target = $region37
  $region36: #{aim_lightgcn_forward.4} parent=0 // pred_region
    _
  $region37: #{aim_lightgcn_forward.4} parent=0 // pred_fallthru
    _
  // Predicated region
  $region38: #{aim_lightgcn_forward.4} parent=0 // pred_check
    _
  $region39: #{aim_lightgcn_forward.4} parent=0 // pred_check_branch
    %971 = sbr.rel (0) target = $region41
  $region40: #{aim_lightgcn_forward.4} parent=0 // pred_region
    _
  $region41: #{aim_lightgcn_forward.4} parent=0 // pred_fallthru
    _

// kernel: aim_lightgcn_forward.5
$region0: #{aim_lightgcn_forward.5}
  #allocation0 [shape = 'u32[]', space=smem, size = 0x4, offset = 0x4, fixed_abs, tag = 'smem constant byte address 0x4 - core index']
  #allocation1 [shape = 'u32[144,128]{1,0:T(1,128)}', space=vmem, size = 0x12000, scoped, tag = 'internal scratch']
  #allocation2 [shape = 'f32[256,128]{1,0:T(8,128)}', space=vmem, size = 0x20000, scoped, tag = 'scratch operand']
  #allocation3 [shape = 'f32[1]{0:T(128)S(6)}', space=smem, size = 0x200, scoped, tag = 'scoped memory for aim_lightgcn_forward.5']
  %s0 = inlined_call_operand.vmem [shape: bf16[256,256], index: 0, kind: input, shape index: {}]
  %s1 = inlined_call_operand.vmem [shape: bf16[256,128], index: 1, kind: input, shape index: {}]
  %s2 = inlined_call_operand.vmem [shape: f32[256,128], index: 2, kind: input, shape index: {}, may-alias: {2,5}]
  %s3 = inlined_call_operand.<no memory space> [shape: f32[1], index: 3, kind: input, shape index: {}]
  %s4 = inlined_call_operand.hbm [shape: bf16[256,128], index: 4, kind: output, shape index: {0}]
  %s5 = inlined_call_operand.vmem [shape: f32[256,128], index: 5, kind: output, shape index: {1}, may-alias: {2,5}]
  %6 = xla_tuple %s4, %s5
  %s7 = sld [smem:[#allocation0]]
  $region42: #{aim_lightgcn_forward.5} parent=0
    _
  %s9 = ssub.s32 1, %s7
  %s10 = scalar_select 0, %s9, %s7
  %11 = sst [smem:[#allocation3]] %s3
  $region1: #{aim_lightgcn_forward.5} parent=0
    #allocation4 [shape = 'u8[65536]{0}', space=vmem, size = 0x10000, scoped, tag = 'output window, operand 0, single buffered']
    #allocation5 [shape = 's32[1]{0}', space=sflag, size = 0x4, scoped, tag = 'scoped memory for aim_lightgcn_forward.5']
    %12 = vsyncpa [#allocation5], 0
    // Predicated region
    $region2: #{aim_lightgcn_forward.5} parent=1 // pred_check
      _
    $region3: #{aim_lightgcn_forward.5} parent=1 // pred_check_branch
      %14 = sbr.rel (0) target = $region5
    $region4: #{aim_lightgcn_forward.5} parent=1 // pred_region
      _
    $region5: #{aim_lightgcn_forward.5} parent=1 // pred_fallthru
      _
    // Predicated region
    $region6: #{aim_lightgcn_forward.5} parent=1 // pred_check
      _
    $region7: #{aim_lightgcn_forward.5} parent=1 // pred_check_branch
      %16 = sbr.rel (0) target = $region9
    $region8: #{aim_lightgcn_forward.5} parent=1 // pred_region
      _
    $region9: #{aim_lightgcn_forward.5} parent=1 // pred_fallthru
      _
    // Predicated region
    $region10: #{aim_lightgcn_forward.5} parent=1 // pred_check
      _
    $region11: #{aim_lightgcn_forward.5} parent=1 // pred_check_branch
      %18 = sbr.rel (0) target = $region13
    $region12: #{aim_lightgcn_forward.5} parent=1 // pred_region
      _
    $region13: #{aim_lightgcn_forward.5} parent=1 // pred_fallthru
      _
    // Predicated region
    $region14: #{aim_lightgcn_forward.5} parent=1 // pred_check
      _
    $region15: #{aim_lightgcn_forward.5} parent=1 // pred_check_branch
      %20 = sbr.rel (0) target = $region17
    $region16: #{aim_lightgcn_forward.5} parent=1 // pred_region
      _
    $region17: #{aim_lightgcn_forward.5} parent=1 // pred_fallthru
      _
    %p22 = scmp.eq.s32.totalorder 0, 0
    // Predicated region
    $region18: #{aim_lightgcn_forward.5} parent=1 // pred_check
      %p23 = pneg %p22
    $region19: #{aim_lightgcn_forward.5} parent=1 // pred_check_branch
      %25 = sbr.rel (%p23) target = $region21
    $region20: #{aim_lightgcn_forward.5} parent=1 // pred_region
      %26 = vst [vmem:[#allocation2] sm:$0xff] 0.0
      %27 = vst [vmem:[#allocation2 + $0x8] sm:$0xff] 0.0
      %28 = vst [vmem:[#allocation2 + $0x10] sm:$0xff] 0.0
      %29 = vst [vmem:[#allocation2 + $0x18] sm:$0xff] 0.0
      %30 = vst [vmem:[#allocation2 + $0x20] sm:$0xff] 0.0
      %31 = vst [vmem:[#allocation2 + $0x28] sm:$0xff] 0.0
      %32 = vst [vmem:[#allocation2 + $0x30] sm:$0xff] 0.0
      %33 = vst [vmem:[#allocation2 + $0x38] sm:$0xff] 0.0
      %34 = vst [vmem:[#allocation2 + $0x40] sm:$0xff] 0.0
      %35 = vst [vmem:[#allocation2 + $0x48] sm:$0xff] 0.0
      %36 = vst [vmem:[#allocation2 + $0x50] sm:$0xff] 0.0
      %37 = vst [vmem:[#allocation2 + $0x58] sm:$0xff] 0.0
      %38 = vst [vmem:[#allocation2 + $0x60] sm:$0xff] 0.0
      %39 = vst [vmem:[#allocation2 + $0x68] sm:$0xff] 0.0
      %40 = vst [vmem:[#allocation2 + $0x70] sm:$0xff] 0.0
      %41 = vst [vmem:[#allocation2 + $0x78] sm:$0xff] 0.0
      %42 = vst [vmem:[#allocation2 + $0x80] sm:$0xff] 0.0
      %43 = vst [vmem:[#allocation2 + $0x88] sm:$0xff] 0.0
      %44 = vst [vmem:[#allocation2 + $0x90] sm:$0xff] 0.0
      %45 = vst [vmem:[#allocation2 + $0x98] sm:$0xff] 0.0
      %46 = vst [vmem:[#allocation2 + $0xa0] sm:$0xff] 0.0
      %47 = vst [vmem:[#allocation2 + $0xa8] sm:$0xff] 0.0
      %48 = vst [vmem:[#allocation2 + $0xb0] sm:$0xff] 0.0
      %49 = vst [vmem:[#allocation2 + $0xb8] sm:$0xff] 0.0
      %50 = vst [vmem:[#allocation2 + $0xc0] sm:$0xff] 0.0
      %51 = vst [vmem:[#allocation2 + $0xc8] sm:$0xff] 0.0
      %52 = vst [vmem:[#allocation2 + $0xd0] sm:$0xff] 0.0
      %53 = vst [vmem:[#allocation2 + $0xd8] sm:$0xff] 0.0
      %54 = vst [vmem:[#allocation2 + $0xe0] sm:$0xff] 0.0
      %55 = vst [vmem:[#allocation2 + $0xe8] sm:$0xff] 0.0
      %56 = vst [vmem:[#allocation2 + $0xf0] sm:$0xff] 0.0
      %57 = vst [vmem:[#allocation2 + $0xf8] sm:$0xff] 0.0
    $region21: #{aim_lightgcn_forward.5} parent=1 // pred_fallthru
      _
    %s58 = smul.u32 0, 256
    %s59 = sshra.s32 %s58, 3
    %s60 = sand.u32 %s58, 7
    %s61 = smul.addr %s59, 4
    %s62 = scalar_lea.vmem %s1, %s61
    %v63 = vld [vmem:[%s62] sm:$0xf]
    %v64 = vld [vmem:[%s62 + $0x4] sm:$0xf]
    %v65 = vld [vmem:[%s62 + $0x8] sm:$0xf]
    %v66 = vld [vmem:[%s62 + $0xc] sm:$0xf]
    %v67 = vld [vmem:[%s62 + $0x10] sm:$0xf]
    %v68 = vld [vmem:[%s62 + $0x14] sm:$0xf]
    %v69 = vld [vmem:[%s62 + $0x18] sm:$0xf]
    %v70 = vld [vmem:[%s62 + $0x1c] sm:$0xf]
    %v71 = vld [vmem:[%s62 + $0x20] sm:$0xf]
    %v72 = vld [vmem:[%s62 + $0x24] sm:$0xf]
    %v73 = vld [vmem:[%s62 + $0x28] sm:$0xf]
    %v74 = vld [vmem:[%s62 + $0x2c] sm:$0xf]
    %v75 = vld [vmem:[%s62 + $0x30] sm:$0xf]
    %v76 = vld [vmem:[%s62 + $0x34] sm:$0xf]
    %v77 = vld [vmem:[%s62 + $0x38] sm:$0xf]
    %v78 = vld [vmem:[%s62 + $0x3c] sm:$0xf]
    %v79 = vld [vmem:[%s62 + $0x40] sm:$0xf]
    %v80 = vld [vmem:[%s62 + $0x44] sm:$0xf]
    %v81 = vld [vmem:[%s62 + $0x48] sm:$0xf]
    %v82 = vld [vmem:[%s62 + $0x4c] sm:$0xf]
    %v83 = vld [vmem:[%s62 + $0x50] sm:$0xf]
    %v84 = vld [vmem:[%s62 + $0x54] sm:$0xf]
    %v85 = vld [vmem:[%s62 + $0x58] sm:$0xf]
    %v86 = vld [vmem:[%s62 + $0x5c] sm:$0xf]
    %v87 = vld [vmem:[%s62 + $0x60] sm:$0xf]
    %v88 = vld [vmem:[%s62 + $0x64] sm:$0xf]
    %v89 = vld [vmem:[%s62 + $0x68] sm:$0xf]
    %v90 = vld [vmem:[%s62 + $0x6c] sm:$0xf]
    %v91 = vld [vmem:[%s62 + $0x70] sm:$0xf]
    %v92 = vld [vmem:[%s62 + $0x74] sm:$0xf]
    %v93 = vld [vmem:[%s62 + $0x78] sm:$0xf]
    %v94 = vld [vmem:[%s62 + $0x7c] sm:$0xf]
    %v95 = vld [vmem:[#allocation2] sm:$0xff]
    %v96 = vld [vmem:[#allocation2 + $0x8] sm:$0xff]
    %v97 = vld [vmem:[#allocation2 + $0x10] sm:$0xff]
    %v98 = vld [vmem:[#allocation2 + $0x18] sm:$0xff]
    %v99 = vld [vmem:[#allocation2 + $0x20] sm:$0xff]
    %v100 = vld [vmem:[#allocation2 + $0x28] sm:$0xff]
    %v101 = vld [vmem:[#allocation2 + $0x30] sm:$0xff]
    %v102 = vld [vmem:[#allocation2 + $0x38] sm:$0xff]
    %v103 = vld [vmem:[#allocation2 + $0x40] sm:$0xff]
    %v104 = vld [vmem:[#allocation2 + $0x48] sm:$0xff]
    %v105 = vld [vmem:[#allocation2 + $0x50] sm:$0xff]
    %v106 = vld [vmem:[#allocation2 + $0x58] sm:$0xff]
    %v107 = vld [vmem:[#allocation2 + $0x60] sm:$0xff]
    %v108 = vld [vmem:[#allocation2 + $0x68] sm:$0xff]
    %v109 = vld [vmem:[#allocation2 + $0x70] sm:$0xff]
    %v110 = vld [vmem:[#allocation2 + $0x78] sm:$0xff]
    %v111 = vld [vmem:[#allocation2 + $0x80] sm:$0xff]
    %v112 = vld [vmem:[#allocation2 + $0x88] sm:$0xff]
    %v113 = vld [vmem:[#allocation2 + $0x90] sm:$0xff]
    %v114 = vld [vmem:[#allocation2 + $0x98] sm:$0xff]
    %v115 = vld [vmem:[#allocation2 + $0xa0] sm:$0xff]
    %v116 = vld [vmem:[#allocation2 + $0xa8] sm:$0xff]
    %v117 = vld [vmem:[#allocation2 + $0xb0] sm:$0xff]
    %v118 = vld [vmem:[#allocation2 + $0xb8] sm:$0xff]
    %v119 = vld [vmem:[#allocation2 + $0xc0] sm:$0xff]
    %v120 = vld [vmem:[#allocation2 + $0xc8] sm:$0xff]
    %v121 = vld [vmem:[#allocation2 + $0xd0] sm:$0xff]
    %v122 = vld [vmem:[#allocation2 + $0xd8] sm:$0xff]
    %v123 = vld [vmem:[#allocation2 + $0xe0] sm:$0xff]
    %v124 = vld [vmem:[#allocation2 + $0xe8] sm:$0xff]
    %v125 = vld [vmem:[#allocation2 + $0xf0] sm:$0xff]
    %v126 = vld [vmem:[#allocation2 + $0xf8] sm:$0xff]
    %v127 = vld [vmem:[%s0] sm:$0xff]
    %v128 = vld [vmem:[%s0 + $0x8] sm:$0xff]
    %v129 = vld [vmem:[%s0 + $0x10] sm:$0xff]
    %v130 = vld [vmem:[%s0 + $0x18] sm:$0xff]
    %v131 = vld [vmem:[%s0 + $0x20] sm:$0xff]
    %v132 = vld [vmem:[%s0 + $0x28] sm:$0xff]
    %v133 = vld [vmem:[%s0 + $0x30] sm:$0xff]
    %v134 = vld [vmem:[%s0 + $0x38] sm:$0xff]
    %v135 = vld [vmem:[%s0 + $0x40] sm:$0xff]
    %v136 = vld [vmem:[%s0 + $0x48] sm:$0xff]
    %v137 = vld [vmem:[%s0 + $0x50] sm:$0xff]
    %v138 = vld [vmem:[%s0 + $0x58] sm:$0xff]
    %v139 = vld [vmem:[%s0 + $0x60] sm:$0xff]
    %v140 = vld [vmem:[%s0 + $0x68] sm:$0xff]
    %v141 = vld [vmem:[%s0 + $0x70] sm:$0xff]
    %v142 = vld [vmem:[%s0 + $0x78] sm:$0xff]
    %v143 = vld [vmem:[%s0 + $0x80] sm:$0xff]
    %v144 = vld [vmem:[%s0 + $0x88] sm:$0xff]
    %v145 = vld [vmem:[%s0 + $0x90] sm:$0xff]
    %v146 = vld [vmem:[%s0 + $0x98] sm:$0xff]
    %v147 = vld [vmem:[%s0 + $0xa0] sm:$0xff]
    %v148 = vld [vmem:[%s0 + $0xa8] sm:$0xff]
    %v149 = vld [vmem:[%s0 + $0xb0] sm:$0xff]
    %v150 = vld [vmem:[%s0 + $0xb8] sm:$0xff]
    %v151 = vld [vmem:[%s0 + $0xc0] sm:$0xff]
    %v152 = vld [vmem:[%s0 + $0xc8] sm:$0xff]
    %v153 = vld [vmem:[%s0 + $0xd0] sm:$0xff]
    %v154 = vld [vmem:[%s0 + $0xd8] sm:$0xff]
    %v155 = vld [vmem:[%s0 + $0xe0] sm:$0xff]
    %v156 = vld [vmem:[%s0 + $0xe8] sm:$0xff]
    %v157 = vld [vmem:[%s0 + $0xf0] sm:$0xff]
    %v158 = vld [vmem:[%s0 + $0xf8] sm:$0xff]
    %v191 = vunpack.c.l.b16 %v127
    %v192 = vunpack.c.h.b16 %v127
    %v193 = vunpack.c.l.b16 %v128
    %v194 = vunpack.c.h.b16 %v128
    %v195 = vunpack.c.l.b16 %v129
    %v196 = vunpack.c.h.b16 %v129
    %v197 = vunpack.c.l.b16 %v130
    %v198 = vunpack.c.h.b16 %v130
    %v199 = vunpack.c.l.b16 %v131
    %v200 = vunpack.c.h.b16 %v131
    %v201 = vunpack.c.l.b16 %v132
    %v202 = vunpack.c.h.b16 %v132
    %v203 = vunpack.c.l.b16 %v133
    %v204 = vunpack.c.h.b16 %v133
    %v205 = vunpack.c.l.b16 %v134
    %v206 = vunpack.c.h.b16 %v134
    %v207 = vunpack.c.l.b16 %v135
    %v208 = vunpack.c.h.b16 %v135
    %v209 = vunpack.c.l.b16 %v136
    %v210 = vunpack.c.h.b16 %v136
    %v211 = vunpack.c.l.b16 %v137
    %v212 = vunpack.c.h.b16 %v137
    %v213 = vunpack.c.l.b16 %v138
    %v214 = vunpack.c.h.b16 %v138
    %v215 = vunpack.c.l.b16 %v139
    %v216 = vunpack.c.h.b16 %v139
    %v217 = vunpack.c.l.b16 %v140
    %v218 = vunpack.c.h.b16 %v140
    %v219 = vunpack.c.l.b16 %v141
    %v220 = vunpack.c.h.b16 %v141
    %v221 = vunpack.c.l.b16 %v142
    %v222 = vunpack.c.h.b16 %v142
    %v223 = vunpack.c.l.b16 %v143
    %v224 = vunpack.c.h.b16 %v143
    %v225 = vunpack.c.l.b16 %v144
    %v226 = vunpack.c.h.b16 %v144
    %v227 = vunpack.c.l.b16 %v145
    %v228 = vunpack.c.h.b16 %v145
    %v229 = vunpack.c.l.b16 %v146
    %v230 = vunpack.c.h.b16 %v146
    %v231 = vunpack.c.l.b16 %v147
    %v232 = vunpack.c.h.b16 %v147
    %v233 = vunpack.c.l.b16 %v148
    %v234 = vunpack.c.h.b16 %v148
    %v235 = vunpack.c.l.b16 %v149
    %v236 = vunpack.c.h.b16 %v149
    %v237 = vunpack.c.l.b16 %v150
    %v238 = vunpack.c.h.b16 %v150
    %v239 = vunpack.c.l.b16 %v151
    %v240 = vunpack.c.h.b16 %v151
    %v241 = vunpack.c.l.b16 %v152
    %v242 = vunpack.c.h.b16 %v152
    %v243 = vunpack.c.l.b16 %v153
    %v244 = vunpack.c.h.b16 %v153
    %v245 = vunpack.c.l.b16 %v154
    %v246 = vunpack.c.h.b16 %v154
    %v247 = vunpack.c.l.b16 %v155
    %v248 = vunpack.c.h.b16 %v155
    %v249 = vunpack.c.l.b16 %v156
    %v250 = vunpack.c.h.b16 %v156
    %v251 = vunpack.c.l.b16 %v157
    %v252 = vunpack.c.h.b16 %v157
    %v253 = vunpack.c.l.b16 %v158
    %v254 = vunpack.c.h.b16 %v158
    %v255 = vpack.c.b16 %v193, %v191
    %v256 = vpack.c.b16 %v194, %v192
    %v257 = vpack.c.b16 %v197, %v195
    %v258 = vpack.c.b16 %v198, %v196
    %v259 = vpack.c.b16 %v201, %v199
    %v260 = vpack.c.b16 %v202, %v200
    %v261 = vpack.c.b16 %v205, %v203
    %v262 = vpack.c.b16 %v206, %v204
    %v263 = vpack.c.b16 %v209, %v207
    %v264 = vpack.c.b16 %v210, %v208
    %v265 = vpack.c.b16 %v213, %v211
    %v266 = vpack.c.b16 %v214, %v212
    %v267 = vpack.c.b16 %v217, %v215
    %v268 = vpack.c.b16 %v218, %v216
    %v269 = vpack.c.b16 %v221, %v219
    %v270 = vpack.c.b16 %v222, %v220
    %v271 = vpack.c.b16 %v225, %v223
    %v272 = vpack.c.b16 %v226, %v224
    %v273 = vpack.c.b16 %v229, %v227
    %v274 = vpack.c.b16 %v230, %v228
    %v275 = vpack.c.b16 %v233, %v231
    %v276 = vpack.c.b16 %v234, %v232
    %v277 = vpack.c.b16 %v237, %v235
    %v278 = vpack.c.b16 %v238, %v236
    %v279 = vpack.c.b16 %v241, %v239
    %v280 = vpack.c.b16 %v242, %v240
    %v281 = vpack.c.b16 %v245, %v243
    %v282 = vpack.c.b16 %v246, %v244
    %v283 = vpack.c.b16 %v249, %v247
    %v284 = vpack.c.b16 %v250, %v248
    %v285 = vpack.c.b16 %v253, %v251
    %v286 = vpack.c.b16 %v254, %v252
    %v351 = vunpack.c.l.b16 %v63
    %v352 = vunpack.c.l.b16 %v64
    %v353 = vunpack.c.l.b16 %v65
    %v354 = vunpack.c.l.b16 %v66
    %v355 = vunpack.c.l.b16 %v67
    %v356 = vunpack.c.l.b16 %v68
    %v357 = vunpack.c.l.b16 %v69
    %v358 = vunpack.c.l.b16 %v70
    %v359 = vunpack.c.l.b16 %v71
    %v360 = vunpack.c.l.b16 %v72
    %v361 = vunpack.c.l.b16 %v73
    %v362 = vunpack.c.l.b16 %v74
    %v363 = vunpack.c.l.b16 %v75
    %v364 = vunpack.c.l.b16 %v76
    %v365 = vunpack.c.l.b16 %v77
    %v366 = vunpack.c.l.b16 %v78
    %v367 = vunpack.c.l.b16 %v79
    %v368 = vunpack.c.l.b16 %v80
    %v369 = vunpack.c.l.b16 %v81
    %v370 = vunpack.c.l.b16 %v82
    %v371 = vunpack.c.l.b16 %v83
    %v372 = vunpack.c.l.b16 %v84
    %v373 = vunpack.c.l.b16 %v85
    %v374 = vunpack.c.l.b16 %v86
    %v375 = vunpack.c.l.b16 %v87
    %v376 = vunpack.c.l.b16 %v88
    %v377 = vunpack.c.l.b16 %v89
    %v378 = vunpack.c.l.b16 %v90
    %v379 = vunpack.c.l.b16 %v91
    %v380 = vunpack.c.l.b16 %v92
    %v381 = vunpack.c.l.b16 %v93
    %v382 = vunpack.c.l.b16 %v94
    %v383 = vpack.c.b16 %v352, %v351
    %v384 = vpack.c.b16 %v354, %v353
    %v385 = vpack.c.b16 %v356, %v355
    %v386 = vpack.c.b16 %v358, %v357
    %v387 = vpack.c.b16 %v360, %v359
    %v388 = vpack.c.b16 %v362, %v361
    %v389 = vpack.c.b16 %v364, %v363
    %v390 = vpack.c.b16 %v366, %v365
    %v391 = vpack.c.b16 %v368, %v367
    %v392 = vpack.c.b16 %v370, %v369
    %v393 = vpack.c.b16 %v372, %v371
    %v394 = vpack.c.b16 %v374, %v373
    %v395 = vpack.c.b16 %v376, %v375
    %v396 = vpack.c.b16 %v378, %v377
    %v397 = vpack.c.b16 %v380, %v379
    %v398 = vpack.c.b16 %v382, %v381
    %415 = vmatprep.subr.bf16.mxu0 0
    %416 = vmatpush1.bf16.msra.mxu0 %v383
    %417 = vmatprep.subr.bf16.mxu0 0
    %418 = vmatpush1.bf16.msra.mxu0 %v384
    %419 = vmatprep.subr.bf16.mxu0 0
    %420 = vmatpush1.bf16.msra.mxu0 %v385
    %421 = vmatprep.subr.bf16.mxu0 0
    %422 = vmatpush1.bf16.msra.mxu0 %v386
    %423 = vmatprep.subr.bf16.mxu0 0
    %424 = vmatpush1.bf16.msra.mxu0 %v387
    %425 = vmatprep.subr.bf16.mxu0 0
    %426 = vmatpush1.bf16.msra.mxu0 %v388
    %427 = vmatprep.subr.bf16.mxu0 0
    %428 = vmatpush1.bf16.msra.mxu0 %v389
    %429 = vmatprep.subr.bf16.mxu0 0
    %430 = vmatpush1.bf16.msra.mxu0 %v390
    %431 = vmatprep.subr.bf16.mxu0 0
    %432 = vmatpush1.bf16.msra.mxu0 %v391
    %433 = vmatprep.subr.bf16.mxu0 0
    %434 = vmatpush1.bf16.msra.mxu0 %v392
    %435 = vmatprep.subr.bf16.mxu0 0
    %436 = vmatpush1.bf16.msra.mxu0 %v393
    %437 = vmatprep.subr.bf16.mxu0 0
    %438 = vmatpush1.bf16.msra.mxu0 %v394
    %439 = vmatprep.subr.bf16.mxu0 0
    %440 = vmatpush1.bf16.msra.mxu0 %v395
    %441 = vmatprep.subr.bf16.mxu0 0
    %442 = vmatpush1.bf16.msra.mxu0 %v396
    %443 = vmatprep.subr.bf16.mxu0 0
    %444 = vmatpush1.bf16.msra.mxu0 %v397
    %445 = vmatprep.subr.bf16.mxu0 0
    %446 = vmatpush1.bf16.msra.mxu0 %v398
    %447 = vmatprep.mubr.bf16.mxu0 %v256
    %448 = vmatmul.mubr.bf16.gmra.mrb[0].mxu0 %v255
    %v449 = vpop.f32.mrb[0].mxu0
    %v450 = vadd.f32 0.0, %v449
    %v451 = vpop.f32.mrb[0].mxu0
    %v452 = vpop.f32.mrb[0].mxu0
    %v453 = vadd.f32 0.0, %v452
    %v454 = vpop.f32.mrb[0].mxu0
    %455 = vmatprep.mubr.bf16.mxu0 %v258
    %456 = vmatmul.mubr.bf16.gmra.mrb[0].mxu0 %v257
    %v457 = vpop.f32.mrb[0].mxu0
    %v458 = vadd.f32 0.0, %v457
    %v459 = vpop.f32.mrb[0].mxu0
    %v460 = vpop.f32.mrb[0].mxu0
    %v461 = vadd.f32 0.0, %v460
    %v462 = vpop.f32.mrb[0].mxu0
    %463 = vmatprep.mubr.bf16.mxu0 %v260
    %464 = vmatmul.mubr.bf16.gmra.mrb[0].mxu0 %v259
    %v465 = vpop.f32.mrb[0].mxu0
    %v466 = vadd.f32 0.0, %v465
    %v467 = vpop.f32.mrb[0].mxu0
    %v468 = vpop.f32.mrb[0].mxu0
    %v469 = vadd.f32 0.0, %v468
    %v470 = vpop.f32.mrb[0].mxu0
    %471 = vmatprep.mubr.bf16.mxu0 %v262
    %472 = vmatmul.mubr.bf16.gmra.mrb[0].mxu0 %v261
    %v473 = vpop.f32.mrb[0].mxu0
    %v474 = vadd.f32 0.0, %v473
    %v475 = vpop.f32.mrb[0].mxu0
    %v476 = vpop.f32.mrb[0].mxu0
    %v477 = vadd.f32 0.0, %v476
    %v478 = vpop.f32.mrb[0].mxu0
    %479 = vmatprep.mubr.bf16.mxu0 %v264
    %480 = vmatmul.mubr.bf16.gmra.mrb[0].mxu0 %v263
    %v481 = vpop.f32.mrb[0].mxu0
    %v482 = vadd.f32 0.0, %v481
    %v483 = vpop.f32.mrb[0].mxu0
    %v484 = vpop.f32.mrb[0].mxu0
    %v485 = vadd.f32 0.0, %v484
    %v486 = vpop.f32.mrb[0].mxu0
    %487 = vmatprep.mubr.bf16.mxu0 %v266
    %488 = vmatmul.mubr.bf16.gmra.mrb[0].mxu0 %v265
    %v489 = vpop.f32.mrb[0].mxu0
    %v490 = vadd.f32 0.0, %v489
    %v491 = vpop.f32.mrb[0].mxu0
    %v492 = vpop.f32.mrb[0].mxu0
    %v493 = vadd.f32 0.0, %v492
    %v494 = vpop.f32.mrb[0].mxu0
    %495 = vmatprep.mubr.bf16.mxu0 %v268
    %496 = vmatmul.mubr.bf16.gmra.mrb[0].mxu0 %v267
    %v497 = vpop.f32.mrb[0].mxu0
    %v498 = vadd.f32 0.0, %v497
    %v499 = vpop.f32.mrb[0].mxu0
    %v500 = vpop.f32.mrb[0].mxu0
    %v501 = vadd.f32 0.0, %v500
    %v502 = vpop.f32.mrb[0].mxu0
    %503 = vmatprep.mubr.bf16.mxu0 %v270
    %504 = vmatmul.mubr.bf16.gmra.mrb[0].mxu0 %v269
    %v505 = vpop.f32.mrb[0].mxu0
    %v506 = vadd.f32 0.0, %v505
    %v507 = vpop.f32.mrb[0].mxu0
    %v508 = vpop.f32.mrb[0].mxu0
    %v509 = vadd.f32 0.0, %v508
    %v510 = vpop.f32.mrb[0].mxu0
    %511 = vmatprep.mubr.bf16.mxu0 %v272
    %512 = vmatmul.mubr.bf16.gmra.mrb[0].mxu0 %v271
    %v513 = vpop.f32.mrb[0].mxu0
    %v514 = vadd.f32 0.0, %v513
    %v515 = vpop.f32.mrb[0].mxu0
    %v516 = vpop.f32.mrb[0].mxu0
    %v517 = vadd.f32 0.0, %v516
    %v518 = vpop.f32.mrb[0].mxu0
    %519 = vmatprep.mubr.bf16.mxu0 %v274
    %520 = vmatmul.mubr.bf16.gmra.mrb[0].mxu0 %v273
    %v521 = vpop.f32.mrb[0].mxu0
    %v522 = vadd.f32 0.0, %v521
    %v523 = vpop.f32.mrb[0].mxu0
    %v524 = vpop.f32.mrb[0].mxu0
    %v525 = vadd.f32 0.0, %v524
    %v526 = vpop.f32.mrb[0].mxu0
    %527 = vmatprep.mubr.bf16.mxu0 %v276
    %528 = vmatmul.mubr.bf16.gmra.mrb[0].mxu0 %v275
    %v529 = vpop.f32.mrb[0].mxu0
    %v530 = vadd.f32 0.0, %v529
    %v531 = vpop.f32.mrb[0].mxu0
    %v532 = vpop.f32.mrb[0].mxu0
    %v533 = vadd.f32 0.0, %v532
    %v534 = vpop.f32.mrb[0].mxu0
    %535 = vmatprep.mubr.bf16.mxu0 %v278
    %536 = vmatmul.mubr.bf16.gmra.mrb[0].mxu0 %v277
    %v537 = vpop.f32.mrb[0].mxu0
    %v538 = vadd.f32 0.0, %v537
    %v539 = vpop.f32.mrb[0].mxu0
    %v540 = vpop.f32.mrb[0].mxu0
    %v541 = vadd.f32 0.0, %v540
    %v542 = vpop.f32.mrb[0].mxu0
    %543 = vmatprep.mubr.bf16.mxu0 %v280
    %544 = vmatmul.mubr.bf16.gmra.mrb[0].mxu0 %v279
    %v545 = vpop.f32.mrb[0].mxu0
    %v546 = vadd.f32 0.0, %v545
    %v547 = vpop.f32.mrb[0].mxu0
    %v548 = vpop.f32.mrb[0].mxu0
    %v549 = vadd.f32 0.0, %v548
    %v550 = vpop.f32.mrb[0].mxu0
    %551 = vmatprep.mubr.bf16.mxu0 %v282
    %552 = vmatmul.mubr.bf16.gmra.mrb[0].mxu0 %v281
    %v553 = vpop.f32.mrb[0].mxu0
    %v554 = vadd.f32 0.0, %v553
    %v555 = vpop.f32.mrb[0].mxu0
    %v556 = vpop.f32.mrb[0].mxu0
    %v557 = vadd.f32 0.0, %v556
    %v558 = vpop.f32.mrb[0].mxu0
    %559 = vmatprep.mubr.bf16.mxu0 %v284
    %560 = vmatmul.mubr.bf16.gmra.mrb[0].mxu0 %v283
    %v561 = vpop.f32.mrb[0].mxu0
    %v562 = vadd.f32 0.0, %v561
    %v563 = vpop.f32.mrb[0].mxu0
    %v564 = vpop.f32.mrb[0].mxu0
    %v565 = vadd.f32 0.0, %v564
    %v566 = vpop.f32.mrb[0].mxu0
    %567 = vmatprep.mubr.bf16.mxu0 %v286
    %568 = vmatmul.mubr.bf16.gmra.mrb[0].mxu0 %v285
    %v569 = vpop.f32.mrb[0].mxu0
    %v570 = vadd.f32 0.0, %v569
    %v571 = vpop.f32.mrb[0].mxu0
    %v572 = vpop.f32.mrb[0].mxu0
    %v573 = vadd.f32 0.0, %v572
    %v574 = vpop.f32.mrb[0].mxu0
    %575 = vdwg.mxu0
    %v576 = vadd.f32 %v95, %v450
    %v577 = vadd.f32 %v96, %v453
    %v578 = vadd.f32 %v97, %v458
    %v579 = vadd.f32 %v98, %v461
    %v580 = vadd.f32 %v99, %v466
    %v581 = vadd.f32 %v100, %v469
    %v582 = vadd.f32 %v101, %v474
    %v583 = vadd.f32 %v102, %v477
    %v584 = vadd.f32 %v103, %v482
    %v585 = vadd.f32 %v104, %v485
    %v586 = vadd.f32 %v105, %v490
    %v587 = vadd.f32 %v106, %v493
    %v588 = vadd.f32 %v107, %v498
    %v589 = vadd.f32 %v108, %v501
    %v590 = vadd.f32 %v109, %v506
    %v591 = vadd.f32 %v110, %v509
    %v592 = vadd.f32 %v111, %v514
    %v593 = vadd.f32 %v112, %v517
    %v594 = vadd.f32 %v113, %v522
    %v595 = vadd.f32 %v114, %v525
    %v596 = vadd.f32 %v115, %v530
    %v597 = vadd.f32 %v116, %v533
    %v598 = vadd.f32 %v117, %v538
    %v599 = vadd.f32 %v118, %v541
    %v600 = vadd.f32 %v119, %v546
    %v601 = vadd.f32 %v120, %v549
    %v602 = vadd.f32 %v121, %v554
    %v603 = vadd.f32 %v122, %v557
    %v604 = vadd.f32 %v123, %v562
    %v605 = vadd.f32 %v124, %v565
    %v606 = vadd.f32 %v125, %v570
    %v607 = vadd.f32 %v126, %v573
    %608 = vst [vmem:[#allocation2] sm:$0xff] %v576
    %609 = vst [vmem:[#allocation2 + $0x8] sm:$0xff] %v577
    %610 = vst [vmem:[#allocation2 + $0x10] sm:$0xff] %v578
    %611 = vst [vmem:[#allocation2 + $0x18] sm:$0xff] %v579
    %612 = vst [vmem:[#allocation2 + $0x20] sm:$0xff] %v580
    %613 = vst [vmem:[#allocation2 + $0x28] sm:$0xff] %v581
    %614 = vst [vmem:[#allocation2 + $0x30] sm:$0xff] %v582
    %615 = vst [vmem:[#allocation2 + $0x38] sm:$0xff] %v583
    %616 = vst [vmem:[#allocation2 + $0x40] sm:$0xff] %v584
    %617 = vst [vmem:[#allocation2 + $0x48] sm:$0xff] %v585
    %618 = vst [vmem:[#allocation2 + $0x50] sm:$0xff] %v586
    %619 = vst [vmem:[#allocation2 + $0x58] sm:$0xff] %v587
    %620 = vst [vmem:[#allocation2 + $0x60] sm:$0xff] %v588
    %621 = vst [vmem:[#allocation2 + $0x68] sm:$0xff] %v589
    %622 = vst [vmem:[#allocation2 + $0x70] sm:$0xff] %v590
    %623 = vst [vmem:[#allocation2 + $0x78] sm:$0xff] %v591
    %624 = vst [vmem:[#allocation2 + $0x80] sm:$0xff] %v592
    %625 = vst [vmem:[#allocation2 + $0x88] sm:$0xff] %v593
    %626 = vst [vmem:[#allocation2 + $0x90] sm:$0xff] %v594
    %627 = vst [vmem:[#allocation2 + $0x98] sm:$0xff] %v595
    %628 = vst [vmem:[#allocation2 + $0xa0] sm:$0xff] %v596
    %629 = vst [vmem:[#allocation2 + $0xa8] sm:$0xff] %v597
    %630 = vst [vmem:[#allocation2 + $0xb0] sm:$0xff] %v598
    %631 = vst [vmem:[#allocation2 + $0xb8] sm:$0xff] %v599
    %632 = vst [vmem:[#allocation2 + $0xc0] sm:$0xff] %v600
    %633 = vst [vmem:[#allocation2 + $0xc8] sm:$0xff] %v601
    %634 = vst [vmem:[#allocation2 + $0xd0] sm:$0xff] %v602
    %635 = vst [vmem:[#allocation2 + $0xd8] sm:$0xff] %v603
    %636 = vst [vmem:[#allocation2 + $0xe0] sm:$0xff] %v604
    %637 = vst [vmem:[#allocation2 + $0xe8] sm:$0xff] %v605
    %638 = vst [vmem:[#allocation2 + $0xf0] sm:$0xff] %v606
    %639 = vst [vmem:[#allocation2 + $0xf8] sm:$0xff] %v607
    // Predicated region
    $region22: #{aim_lightgcn_forward.5} parent=1 // pred_check
      %p640 = pneg %p22
    $region23: #{aim_lightgcn_forward.5} parent=1 // pred_check_branch
      %642 = sbr.rel (%p640) target = $region25
    $region24: #{aim_lightgcn_forward.5} parent=1 // pred_region
      %v643 = vld [vmem:[#allocation2] sm:$0xff]
      %v644 = vld [vmem:[#allocation2 + $0x8] sm:$0xff]
      %v645 = vld [vmem:[#allocation2 + $0x10] sm:$0xff]
      %v646 = vld [vmem:[#allocation2 + $0x18] sm:$0xff]
      %v647 = vld [vmem:[#allocation2 + $0x20] sm:$0xff]
      %v648 = vld [vmem:[#allocation2 + $0x28] sm:$0xff]
      %v649 = vld [vmem:[#allocation2 + $0x30] sm:$0xff]
      %v650 = vld [vmem:[#allocation2 + $0x38] sm:$0xff]
      %v651 = vld [vmem:[#allocation2 + $0x40] sm:$0xff]
      %v652 = vld [vmem:[#allocation2 + $0x48] sm:$0xff]
      %v653 = vld [vmem:[#allocation2 + $0x50] sm:$0xff]
      %v654 = vld [vmem:[#allocation2 + $0x58] sm:$0xff]
      %v655 = vld [vmem:[#allocation2 + $0x60] sm:$0xff]
      %v656 = vld [vmem:[#allocation2 + $0x68] sm:$0xff]
      %v657 = vld [vmem:[#allocation2 + $0x70] sm:$0xff]
      %v658 = vld [vmem:[#allocation2 + $0x78] sm:$0xff]
      %v659 = vld [vmem:[#allocation2 + $0x80] sm:$0xff]
      %v660 = vld [vmem:[#allocation2 + $0x88] sm:$0xff]
      %v661 = vld [vmem:[#allocation2 + $0x90] sm:$0xff]
      %v662 = vld [vmem:[#allocation2 + $0x98] sm:$0xff]
      %v663 = vld [vmem:[#allocation2 + $0xa0] sm:$0xff]
      %v664 = vld [vmem:[#allocation2 + $0xa8] sm:$0xff]
      %v665 = vld [vmem:[#allocation2 + $0xb0] sm:$0xff]
      %v666 = vld [vmem:[#allocation2 + $0xb8] sm:$0xff]
      %v667 = vld [vmem:[#allocation2 + $0xc0] sm:$0xff]
      %v668 = vld [vmem:[#allocation2 + $0xc8] sm:$0xff]
      %v669 = vld [vmem:[#allocation2 + $0xd0] sm:$0xff]
      %v670 = vld [vmem:[#allocation2 + $0xd8] sm:$0xff]
      %v671 = vld [vmem:[#allocation2 + $0xe0] sm:$0xff]
      %v672 = vld [vmem:[#allocation2 + $0xe8] sm:$0xff]
      %v673 = vld [vmem:[#allocation2 + $0xf0] sm:$0xff]
      %v674 = vld [vmem:[#allocation2 + $0xf8] sm:$0xff]
      %v675 = vpack.c.bf16 %v644, %v643
      %v676 = vpack.c.bf16 %v646, %v645
      %v677 = vpack.c.bf16 %v648, %v647
      %v678 = vpack.c.bf16 %v650, %v649
      %v679 = vpack.c.bf16 %v652, %v651
      %v680 = vpack.c.bf16 %v654, %v653
      %v681 = vpack.c.bf16 %v656, %v655
      %v682 = vpack.c.bf16 %v658, %v657
      %v683 = vpack.c.bf16 %v660, %v659
      %v684 = vpack.c.bf16 %v662, %v661
      %v685 = vpack.c.bf16 %v664, %v663
      %v686 = vpack.c.bf16 %v666, %v665
      %v687 = vpack.c.bf16 %v668, %v667
      %v688 = vpack.c.bf16 %v670, %v669
      %v689 = vpack.c.bf16 %v672, %v671
      %v690 = vpack.c.bf16 %v674, %v673
      %v707 = vunpack.c.l.b16 %v675
      %v708 = vunpack.c.h.b16 %v675
      %v709 = vunpack.c.l.b16 %v676
      %v710 = vunpack.c.h.b16 %v676
      %v711 = vunpack.c.l.b16 %v677
      %v712 = vunpack.c.h.b16 %v677
      %v713 = vunpack.c.l.b16 %v678
      %v714 = vunpack.c.h.b16 %v678
      %v715 = vunpack.c.l.b16 %v679
      %v716 = vunpack.c.h.b16 %v679
      %v717 = vunpack.c.l.b16 %v680
      %v718 = vunpack.c.h.b16 %v680
      %v719 = vunpack.c.l.b16 %v681
      %v720 = vunpack.c.h.b16 %v681
      %v721 = vunpack.c.l.b16 %v682
      %v722 = vunpack.c.h.b16 %v682
      %v723 = vunpack.c.l.b16 %v683
      %v724 = vunpack.c.h.b16 %v683
      %v725 = vunpack.c.l.b16 %v684
      %v726 = vunpack.c.h.b16 %v684
      %v727 = vunpack.c.l.b16 %v685
      %v728 = vunpack.c.h.b16 %v685
      %v729 = vunpack.c.l.b16 %v686
      %v730 = vunpack.c.h.b16 %v686
      %v731 = vunpack.c.l.b16 %v687
      %v732 = vunpack.c.h.b16 %v687
      %v733 = vunpack.c.l.b16 %v688
      %v734 = vunpack.c.h.b16 %v688
      %v735 = vunpack.c.l.b16 %v689
      %v736 = vunpack.c.h.b16 %v689
      %v737 = vunpack.c.l.b16 %v690
      %v738 = vunpack.c.h.b16 %v690
      %v739 = vpack.c.b16 %v707, %v707
      %v740 = vpack.c.b16 %v708, %v708
      %v741 = vpack.c.b16 %v709, %v709
      %v742 = vpack.c.b16 %v710, %v710
      %v743 = vpack.c.b16 %v711, %v711
      %v744 = vpack.c.b16 %v712, %v712
      %v745 = vpack.c.b16 %v713, %v713
      %v746 = vpack.c.b16 %v714, %v714
      %v747 = vpack.c.b16 %v715, %v715
      %v748 = vpack.c.b16 %v716, %v716
      %v749 = vpack.c.b16 %v717, %v717
      %v750 = vpack.c.b16 %v718, %v718
      %v751 = vpack.c.b16 %v719, %v719
      %v752 = vpack.c.b16 %v720, %v720
      %v753 = vpack.c.b16 %v721, %v721
      %v754 = vpack.c.b16 %v722, %v722
      %v755 = vpack.c.b16 %v723, %v723
      %v756 = vpack.c.b16 %v724, %v724
      %v757 = vpack.c.b16 %v725, %v725
      %v758 = vpack.c.b16 %v726, %v726
      %v759 = vpack.c.b16 %v727, %v727
      %v760 = vpack.c.b16 %v728, %v728
      %v761 = vpack.c.b16 %v729, %v729
      %v762 = vpack.c.b16 %v730, %v730
      %v763 = vpack.c.b16 %v731, %v731
      %v764 = vpack.c.b16 %v732, %v732
      %v765 = vpack.c.b16 %v733, %v733
      %v766 = vpack.c.b16 %v734, %v734
      %v767 = vpack.c.b16 %v735, %v735
      %v768 = vpack.c.b16 %v736, %v736
      %v769 = vpack.c.b16 %v737, %v737
      %v770 = vpack.c.b16 %v738, %v738
      %803 = vst [vmem:[#allocation4] sm:$0xf] %v739
      %804 = vst [vmem:[#allocation4 + $0x4] sm:$0xf] %v740
      %805 = vst [vmem:[#allocation4 + $0x8] sm:$0xf] %v741
      %806 = vst [vmem:[#allocation4 + $0xc] sm:$0xf] %v742
      %807 = vst [vmem:[#allocation4 + $0x10] sm:$0xf] %v743
      %808 = vst [vmem:[#allocation4 + $0x14] sm:$0xf] %v744
      %809 = vst [vmem:[#allocation4 + $0x18] sm:$0xf] %v745
      %810 = vst [vmem:[#allocation4 + $0x1c] sm:$0xf] %v746
      %811 = vst [vmem:[#allocation4 + $0x20] sm:$0xf] %v747
      %812 = vst [vmem:[#allocation4 + $0x24] sm:$0xf] %v748
      %813 = vst [vmem:[#allocation4 + $0x28] sm:$0xf] %v749
      %814 = vst [vmem:[#allocation4 + $0x2c] sm:$0xf] %v750
      %815 = vst [vmem:[#allocation4 + $0x30] sm:$0xf] %v751
      %816 = vst [vmem:[#allocation4 + $0x34] sm:$0xf] %v752
      %817 = vst [vmem:[#allocation4 + $0x38] sm:$0xf] %v753
      %818 = vst [vmem:[#allocation4 + $0x3c] sm:$0xf] %v754
      %819 = vst [vmem:[#allocation4 + $0x40] sm:$0xf] %v755
      %820 = vst [vmem:[#allocation4 + $0x44] sm:$0xf] %v756
      %821 = vst [vmem:[#allocation4 + $0x48] sm:$0xf] %v757
      %822 = vst [vmem:[#allocation4 + $0x4c] sm:$0xf] %v758
      %823 = vst [vmem:[#allocation4 + $0x50] sm:$0xf] %v759
      %824 = vst [vmem:[#allocation4 + $0x54] sm:$0xf] %v760
      %825 = vst [vmem:[#allocation4 + $0x58] sm:$0xf] %v761
      %826 = vst [vmem:[#allocation4 + $0x5c] sm:$0xf] %v762
      %827 = vst [vmem:[#allocation4 + $0x60] sm:$0xf] %v763
      %828 = vst [vmem:[#allocation4 + $0x64] sm:$0xf] %v764
      %829 = vst [vmem:[#allocation4 + $0x68] sm:$0xf] %v765
      %830 = vst [vmem:[#allocation4 + $0x6c] sm:$0xf] %v766
      %831 = vst [vmem:[#allocation4 + $0x70] sm:$0xf] %v767
      %832 = vst [vmem:[#allocation4 + $0x74] sm:$0xf] %v768
      %833 = vst [vmem:[#allocation4 + $0x78] sm:$0xf] %v769
      %834 = vst [vmem:[#allocation4 + $0x7c] sm:$0xf] %v770
      %v835 = vld [vmem:[%s2] sm:$0xff]
      %v836 = vld [vmem:[%s2 + $0x8] sm:$0xff]
      %v837 = vld [vmem:[%s2 + $0x10] sm:$0xff]
      %v838 = vld [vmem:[%s2 + $0x18] sm:$0xff]
      %v839 = vld [vmem:[%s2 + $0x20] sm:$0xff]
      %v840 = vld [vmem:[%s2 + $0x28] sm:$0xff]
      %v841 = vld [vmem:[%s2 + $0x30] sm:$0xff]
      %v842 = vld [vmem:[%s2 + $0x38] sm:$0xff]
      %v843 = vld [vmem:[%s2 + $0x40] sm:$0xff]
      %v844 = vld [vmem:[%s2 + $0x48] sm:$0xff]
      %v845 = vld [vmem:[%s2 + $0x50] sm:$0xff]
      %v846 = vld [vmem:[%s2 + $0x58] sm:$0xff]
      %v847 = vld [vmem:[%s2 + $0x60] sm:$0xff]
      %v848 = vld [vmem:[%s2 + $0x68] sm:$0xff]
      %v849 = vld [vmem:[%s2 + $0x70] sm:$0xff]
      %v850 = vld [vmem:[%s2 + $0x78] sm:$0xff]
      %v851 = vld [vmem:[%s2 + $0x80] sm:$0xff]
      %v852 = vld [vmem:[%s2 + $0x88] sm:$0xff]
      %v853 = vld [vmem:[%s2 + $0x90] sm:$0xff]
      %v854 = vld [vmem:[%s2 + $0x98] sm:$0xff]
      %v855 = vld [vmem:[%s2 + $0xa0] sm:$0xff]
      %v856 = vld [vmem:[%s2 + $0xa8] sm:$0xff]
      %v857 = vld [vmem:[%s2 + $0xb0] sm:$0xff]
      %v858 = vld [vmem:[%s2 + $0xb8] sm:$0xff]
      %v859 = vld [vmem:[%s2 + $0xc0] sm:$0xff]
      %v860 = vld [vmem:[%s2 + $0xc8] sm:$0xff]
      %v861 = vld [vmem:[%s2 + $0xd0] sm:$0xff]
      %v862 = vld [vmem:[%s2 + $0xd8] sm:$0xff]
      %v863 = vld [vmem:[%s2 + $0xe0] sm:$0xff]
      %v864 = vld [vmem:[%s2 + $0xe8] sm:$0xff]
      %v865 = vld [vmem:[%s2 + $0xf0] sm:$0xff]
      %v866 = vld [vmem:[%s2 + $0xf8] sm:$0xff]
      %s867 = sld [smem:[#allocation3]]
      %v868 = vstv %s867
      %v869 = vmul.f32 %v868, %v643
      %v870 = vmul.f32 %v868, %v644
      %v871 = vmul.f32 %v868, %v645
      %v872 = vmul.f32 %v868, %v646
      %v873 = vmul.f32 %v868, %v647
      %v874 = vmul.f32 %v868, %v648
      %v875 = vmul.f32 %v868, %v649
      %v876 = vmul.f32 %v868, %v650
      %v877 = vmul.f32 %v868, %v651
      %v878 = vmul.f32 %v868, %v652
      %v879 = vmul.f32 %v868, %v653
      %v880 = vmul.f32 %v868, %v654
      %v881 = vmul.f32 %v868, %v655
      %v882 = vmul.f32 %v868, %v656
      %v883 = vmul.f32 %v868, %v657
      %v884 = vmul.f32 %v868, %v658
      %v885 = vmul.f32 %v868, %v659
      %v886 = vmul.f32 %v868, %v660
      %v887 = vmul.f32 %v868, %v661
      %v888 = vmul.f32 %v868, %v662
      %v889 = vmul.f32 %v868, %v663
      %v890 = vmul.f32 %v868, %v664
      %v891 = vmul.f32 %v868, %v665
      %v892 = vmul.f32 %v868, %v666
      %v893 = vmul.f32 %v868, %v667
      %v894 = vmul.f32 %v868, %v668
      %v895 = vmul.f32 %v868, %v669
      %v896 = vmul.f32 %v868, %v670
      %v897 = vmul.f32 %v868, %v671
      %v898 = vmul.f32 %v868, %v672
      %v899 = vmul.f32 %v868, %v673
      %v900 = vmul.f32 %v868, %v674
      %v901 = vadd.f32 %v835, %v869
      %v902 = vadd.f32 %v836, %v870
      %v903 = vadd.f32 %v837, %v871
      %v904 = vadd.f32 %v838, %v872
      %v905 = vadd.f32 %v839, %v873
      %v906 = vadd.f32 %v840, %v874
      %v907 = vadd.f32 %v841, %v875
      %v908 = vadd.f32 %v842, %v876
      %v909 = vadd.f32 %v843, %v877
      %v910 = vadd.f32 %v844, %v878
      %v911 = vadd.f32 %v845, %v879
      %v912 = vadd.f32 %v846, %v880
      %v913 = vadd.f32 %v847, %v881
      %v914 = vadd.f32 %v848, %v882
      %v915 = vadd.f32 %v849, %v883
      %v916 = vadd.f32 %v850, %v884
      %v917 = vadd.f32 %v851, %v885
      %v918 = vadd.f32 %v852, %v886
      %v919 = vadd.f32 %v853, %v887
      %v920 = vadd.f32 %v854, %v888
      %v921 = vadd.f32 %v855, %v889
      %v922 = vadd.f32 %v856, %v890
      %v923 = vadd.f32 %v857, %v891
      %v924 = vadd.f32 %v858, %v892
      %v925 = vadd.f32 %v859, %v893
      %v926 = vadd.f32 %v860, %v894
      %v927 = vadd.f32 %v861, %v895
      %v928 = vadd.f32 %v862, %v896
      %v929 = vadd.f32 %v863, %v897
      %v930 = vadd.f32 %v864, %v898
      %v931 = vadd.f32 %v865, %v899
      %v932 = vadd.f32 %v866, %v900
      %933 = vst [vmem:[%s5] sm:$0xff] %v901
      %934 = vst [vmem:[%s5 + $0x8] sm:$0xff] %v902
      %935 = vst [vmem:[%s5 + $0x10] sm:$0xff] %v903
      %936 = vst [vmem:[%s5 + $0x18] sm:$0xff] %v904
      %937 = vst [vmem:[%s5 + $0x20] sm:$0xff] %v905
      %938 = vst [vmem:[%s5 + $0x28] sm:$0xff] %v906
      %939 = vst [vmem:[%s5 + $0x30] sm:$0xff] %v907
      %940 = vst [vmem:[%s5 + $0x38] sm:$0xff] %v908
      %941 = vst [vmem:[%s5 + $0x40] sm:$0xff] %v909
      %942 = vst [vmem:[%s5 + $0x48] sm:$0xff] %v910
      %943 = vst [vmem:[%s5 + $0x50] sm:$0xff] %v911
      %944 = vst [vmem:[%s5 + $0x58] sm:$0xff] %v912
      %945 = vst [vmem:[%s5 + $0x60] sm:$0xff] %v913
      %946 = vst [vmem:[%s5 + $0x68] sm:$0xff] %v914
      %947 = vst [vmem:[%s5 + $0x70] sm:$0xff] %v915
      %948 = vst [vmem:[%s5 + $0x78] sm:$0xff] %v916
      %949 = vst [vmem:[%s5 + $0x80] sm:$0xff] %v917
      %950 = vst [vmem:[%s5 + $0x88] sm:$0xff] %v918
      %951 = vst [vmem:[%s5 + $0x90] sm:$0xff] %v919
      %952 = vst [vmem:[%s5 + $0x98] sm:$0xff] %v920
      %953 = vst [vmem:[%s5 + $0xa0] sm:$0xff] %v921
      %954 = vst [vmem:[%s5 + $0xa8] sm:$0xff] %v922
      %955 = vst [vmem:[%s5 + $0xb0] sm:$0xff] %v923
      %956 = vst [vmem:[%s5 + $0xb8] sm:$0xff] %v924
      %957 = vst [vmem:[%s5 + $0xc0] sm:$0xff] %v925
      %958 = vst [vmem:[%s5 + $0xc8] sm:$0xff] %v926
      %959 = vst [vmem:[%s5 + $0xd0] sm:$0xff] %v927
      %960 = vst [vmem:[%s5 + $0xd8] sm:$0xff] %v928
      %961 = vst [vmem:[%s5 + $0xe0] sm:$0xff] %v929
      %962 = vst [vmem:[%s5 + $0xe8] sm:$0xff] %v930
      %963 = vst [vmem:[%s5 + $0xf0] sm:$0xff] %v931
      %964 = vst [vmem:[%s5 + $0xf8] sm:$0xff] %v932
    $region25: #{aim_lightgcn_forward.5} parent=1 // pred_fallthru
      _
    // Predicated region
    $region26: #{aim_lightgcn_forward.5} parent=1 // pred_check
      _
    $region27: #{aim_lightgcn_forward.5} parent=1 // pred_check_branch
      %966 = sbr.rel (0) target = $region29
    $region28: #{aim_lightgcn_forward.5} parent=1 // pred_region
      %s968 = ssub.s32 2048, 2048
      %969 = vsyncadd [#allocation5], %s968
      %s970 = sshll.u32 [#allocation4], 4
      %s971 = int_to_ptr.vmem [resolvable:$true] %s970
      %976 = dma.vmem_to_hbm [thread:$0]  %s971, 2048, %s4, [#allocation5], 64, 64, 4
    $region29: #{aim_lightgcn_forward.5} parent=1 // pred_fallthru
      _
    // Predicated region
    $region30: #{aim_lightgcn_forward.5} parent=1 // pred_check
      _
    $region31: #{aim_lightgcn_forward.5} parent=1 // pred_check_branch
      %978 = sbr.rel (0) target = $region33
    $region32: #{aim_lightgcn_forward.5} parent=1 // pred_region
      _
    $region33: #{aim_lightgcn_forward.5} parent=1 // pred_fallthru
      _
    // Predicated region
    $region34: #{aim_lightgcn_forward.5} parent=1 // pred_check
      _
    $region35: #{aim_lightgcn_forward.5} parent=1 // pred_check_branch
      %980 = sbr.rel (0) target = $region37
    $region36: #{aim_lightgcn_forward.5} parent=1 // pred_region
      %981 = dma.done [#allocation5], 2048
    $region37: #{aim_lightgcn_forward.5} parent=1 // pred_fallthru
      _
    // Predicated region
    $region38: #{aim_lightgcn_forward.5} parent=1 // pred_check
      _
    $region39: #{aim_lightgcn_forward.5} parent=1 // pred_check_branch
      %983 = sbr.rel (0) target = $region41
    $region40: #{aim_lightgcn_forward.5} parent=1 // pred_region
      _
    $region41: #{aim_lightgcn_forward.5} parent=1 // pred_fallthru
      _
    %984 = vsyncpa [#allocation5], 1

</llo_original>
